<compile_context>
chip_gen: v7x
topology: tpu7x:2x2x1
jax: 0.10.0
libtpu: 0.0.40
codegen_flags: <defaults>
</compile_context>

<pallas_src>
import math

import jax
import jax.numpy as jnp
from jax.experimental import pallas as pl
from jax.experimental.pallas import tpu as pltpu


def _round_up(x, m):
    return ((x + m - 1) // m) * m


def _make_kernel(C_in, C_out, K, K_pad, T, shifts, compute_dtype):
    """shifts: python ints, 1-D offsets of the k^3 taps in the flattened volume."""

    def kernel(seed_ref, nxt_ref, w_ref, b_ref, o_ref, slab_ref, pat_ref):
        q = pl.program_id(1)

        # ---- stage the haloed slab: [tile q | tile q+1] -------------------
        @pl.when(q == 0)
        def _():
            # First lane-tile of this sample: seed from the per-n resident
            # tile-0 block.  Also (re)zero the K-padding rows of the im2col
            # tile here, once per core/sample sweep, so stale VMEM can never
            # reach the matmul (NaN * 0 == NaN).  Rows K..K_pad are never
            # written elsewhere, so the zeros persist across q.
            slab_ref[:, :T] = seed_ref[0]
            if K_pad > K:
                pat_ref[K:, :] = jnp.zeros((K_pad - K, T), compute_dtype)

        @pl.when(q > 0)
        def _():
            # Carry the halo: tile q was loaded last step as the "next" tile.
            slab_ref[:, :T] = slab_ref[:, T:]

        # Incoming tile q+1 (the halo for the forward k^3 shifts).
        slab_ref[:, T:] = nxt_ref[0]

        # ---- on-chip im2col: tap (kd,kh,kw) == contiguous slice at offset s.
        # K ordering is tap-major, channel-minor: row = tap*C_in + c.
        # (Further optimization candidates, not applied here: group taps into
        #  full-sublane-tile stores, or drop pat entirely in favor of 27
        #  per-tap accumulating matmuls — best evaluated with a bundle dump.)
        for idx, s in enumerate(shifts):
            pat_ref[idx * C_in:(idx + 1) * C_in, :] = slab_ref[:, s:s + T]

        # ---- single fused matmul + bias + ReLU.  (C_out, K_pad) @ (K_pad, T)
        # in compute_dtype (bf16 by default) with f32 accumulation; the big T
        # dimension sits on the MXU/lane axis.
        acc = jnp.dot(w_ref[...], pat_ref[...],
                      preferred_element_type=jnp.float32)
        acc = acc + b_ref[...]                       # (C_out, 1) f32 broadcast
        o_ref[0] = jnp.maximum(acc, 0.0).astype(o_ref.dtype)

    return kernel


def conv3d_relu(x, weight, bias, *, t_lane=2048, compute_dtype=jnp.bfloat16,
                out_dtype=jnp.float32):
    """ReLU(Conv3d(x; weight, bias, padding=k//2)).

    x:      (N, C_in, D, H, W) float32
    weight: (C_out, C_in, k, k, k)
    bias:   (C_out,)
    returns (N, C_out, D, H, W) in out_dtype (f32 default, matching the module)

    t_lane:        lane-tile size target (multiple of 128), tuning knob.
    compute_dtype: dtype used to stream x / weight and for the on-chip slab /
                   im2col tile / matmul operands.  bf16 halves HBM + VMEM
                   traffic on all generations (v5e benefits most — lowest HBM
                   bandwidth); accumulation, bias add and ReLU are always f32.
    """
    N, C_in, D, H, W = x.shape
    C_out, C_in_w, kD, kH, kW = weight.shape
    assert C_in_w == C_in
    # ConvLayer uses a scalar kernel_size; odd k => 'SAME'-style output size.
    assert kD == kH == kW and kD % 2 == 1, "expected cubic, odd kernel_size"
    k = kD
    pad = k // 2
    Dp, Hp, Wp = D + 2 * pad, H + 2 * pad, W + 2 * pad
    L = Dp * Hp * Wp                                  # flattened padded volume

    # Per-tap 1-D shifts in the flattened padded volume (tap-major order).
    shifts = [kd * Hp * Wp + kh * Wp + kw
              for kd in range(k) for kh in range(k) for kw in range(k)]
    s_max = shifts[-1]

    # Lane-tile size: multiple of 128, >= the largest halo shift (so every tap
    # slice fits inside the 2*T slab), <= t_lane, and small enough to leave
    # >= 2 tiles per sample when the volume allows (pipelining / megacore).
    T = _round_up(max(min(t_lane, pl.cdiv(L, 2)), s_max, 128), 128)
    Q = pl.cdiv(L, T)                                 # lane tiles per sample

    K = C_in * k * k * k                              # 108 for C_in=4, k=3
    K_pad = _round_up(K, 128)                         # aligned MXU contraction

    # --- cheap glue: pad + flatten in compute_dtype (no k^3 materialization).
    xp = jnp.pad(x.astype(compute_dtype),
                 ((0, 0), (0, 0), (pad, pad), (pad, pad), (pad, pad)))
    xflat = xp.reshape(N, C_in, L)
    xflat = jnp.pad(xflat, ((0, 0), (0, 0), (0, (Q + 1) * T - L)))

    # Weight as (C_out, K_pad) with K ordered (kd, kh, kw, c) to match patches.
    w2 = weight.transpose(0, 2, 3, 4, 1).reshape(C_out, K)
    w2 = jnp.pad(w2, ((0, 0), (0, K_pad - K))).astype(compute_dtype)
    b2 = bias.reshape(C_out, 1).astype(jnp.float32)

    kernel = _make_kernel(C_in, C_out, K, K_pad, T, shifts, compute_dtype)

    out_flat = pl.pallas_call(
        kernel,
        out_shape=jax.ShapeDtypeStruct((N, C_out, Q * T), out_dtype),
        grid_spec=pltpu.PrefetchScalarGridSpec(
            num_scalar_prefetch=0,
            grid=(N, Q),
            in_specs=[
                # Tile 0 of sample n: constant index per n => DMA'd only when
                # n changes (stays resident); used only at q == 0 to seed the
                # slab.
                pl.BlockSpec((1, C_in, T), lambda n, q: (n, 0, 0)),
                # Incoming tile q+1 (halo).  Together with the in-kernel carry
                # this means every input tile is read from HBM exactly once.
                pl.BlockSpec((1, C_in, T), lambda n, q: (n, 0, q + 1)),
                pl.BlockSpec((C_out, K_pad), lambda n, q: (0, 0)),   # resident
                pl.BlockSpec((C_out, 1), lambda n, q: (0, 0)),       # resident
            ],
            # Lane-dense output tile, written directly in (N, C_out, flat).
            out_specs=pl.BlockSpec((1, C_out, T), lambda n, q: (n, 0, q)),
            scratch_shapes=[
                pltpu.VMEM((C_in, 2 * T), compute_dtype),   # haloed slab
                pltpu.VMEM((K_pad, T), compute_dtype),      # on-chip im2col
            ],
        ),
        # q must stay "arbitrary": the halo carry and the q==0 pat-pad zeroing
        # rely on each core sweeping q = 0..Q-1 in order for every n it owns.
        # n is "parallel" so it can shard across v7x's two TensorCores.
        compiler_params=pltpu.CompilerParams(
            dimension_semantics=("parallel", "arbitrary")),
    )(xflat, xflat, w2, b2)

    # Valid conv outputs live at flat index d*Hp*Wp + h*Wp + w; crop the rest.
    out = out_flat[:, :, :L].reshape(N, C_out, Dp, Hp, Wp)[:, :, :D, :H, :W]
    return out


if __name__ == "__main__":
    # Small shapes consistent with the module: N=2, C_in=4, C_out=8, k=3, D=H=W=8
    N, C_in, C_out, ks, D, H, W = 2, 4, 8, 3, 8, 8, 8

    key = jax.random.PRNGKey(0)
    kx, kw_, kb = jax.random.split(key, 3)

    x = jax.random.normal(kx, (N, C_in, D, H, W), dtype=jnp.float32)
    fan_in = C_in * ks * ks * ks
    bound = 1.0 / math.sqrt(float(fan_in))   # PyTorch default Conv3d init range
    weight = jax.random.uniform(kw_, (C_out, C_in, ks, ks, ks),
                                minval=-bound, maxval=bound, dtype=jnp.float32)
    bias = jax.random.uniform(kb, (C_out,),
                              minval=-bound, maxval=bound, dtype=jnp.float32)

    # Reference: XLA conv (same semantics as torch Conv3d(padding=k//2) + ReLU).
    ref = jax.lax.conv_general_dilated(
        x, weight, window_strides=(1, 1, 1), padding="SAME",
        dimension_numbers=("NCDHW", "OIDHW", "NCDHW"))
    ref = jnp.maximum(ref + bias.reshape(1, C_out, 1, 1, 1), 0.0)

    # f32 streaming path: tight check of the fused on-chip-im2col kernel
    # (also exercises both the q==0 seed path and the q>0 halo-carry path).
    out_f32 = jax.block_until_ready(
        conv3d_relu(x, weight, bias, compute_dtype=jnp.float32))
    assert out_f32.shape == (N, C_out, D, H, W)
    assert jnp.allclose(out_f32, ref, atol=1e-4, rtol=1e-4)

    # bf16 streaming path (perf default on all generations): f32 accumulation,
    # tolerance loosened for the bf16 input/weight rounding.
    out_bf16 = jax.block_until_ready(conv3d_relu(x, weight, bias))
    assert out_bf16.shape == (N, C_out, D, H, W)
    assert jnp.allclose(out_bf16, ref, atol=3e-2, rtol=3e-2)

    print("KERNEL_OK")
</pallas_src>

<mosaic_0001>
module attributes {stable_mosaic.version = 11 : i64} {
  func.func @kernel(%arg0: i32, %arg1: i32, %arg2: memref<1x4x512xf32, #tpu.memory_space<vmem>>, %arg3: memref<1x4x512xf32, #tpu.memory_space<vmem>>, %arg4: memref<8x128xf32, #tpu.memory_space<vmem>>, %arg5: memref<8x1xf32, #tpu.memory_space<vmem>>, %arg6: memref<1x8x512xf32, #tpu.memory_space<vmem>>, %arg7: memref<4x1024xf32, #tpu.memory_space<vmem>>, %arg8: memref<128x512xf32, #tpu.memory_space<vmem>>) attributes {dimension_semantics = [#tpu.dimension_semantics<parallel>, #tpu.dimension_semantics<arbitrary>], iteration_bounds = array<i64: 2, 2>, scalar_prefetch = 0 : i64, scratch_operands = 2 : i64, tpu.core_type = #tpu.core_type<tc>, window_params = [{transform_indices = @transform_0, window_bounds = array<i64: 1, 4, 512>}, {transform_indices = @transform_1, window_bounds = array<i64: 1, 4, 512>}, {pipeline_mode = #tpu.pipeline_mode<synchronous>, transform_indices = @transform_2, window_bounds = array<i64: 8, 128>}, {pipeline_mode = #tpu.pipeline_mode<synchronous>, transform_indices = @transform_3, window_bounds = array<i64: 8, 1>}, {transform_indices = @transform_4, window_bounds = array<i64: 1, 8, 512>}]} {
    %c0_i32 = arith.constant 0 : i32
    %0 = arith.cmpi eq, %arg1, %c0_i32 : i32
    %1 = arith.extui %0 : i1 to i32
    %c0_i32_0 = arith.constant 0 : i32
    %2 = arith.cmpi ne, %1, %c0_i32_0 : i32
    scf.if %2 {
      %c0_75 = arith.constant 0 : index
      %c0_76 = arith.constant 0 : index
      %c0_77 = arith.constant 0 : index
      %74 = vector.load %arg2[%c0_75, %c0_76, %c0_77] : memref<1x4x512xf32, #tpu.memory_space<vmem>>, vector<1x4x512xf32>
      %75 = vector.shape_cast %74 : vector<1x4x512xf32> to vector<4x512xf32>
      %c0_78 = arith.constant 0 : index
      %c0_79 = arith.constant 0 : index
      %76 = vector.load %arg7[%c0_78, %c0_79] : memref<4x1024xf32, #tpu.memory_space<vmem>>, vector<4x512xf32>
      tpu.vector_store %arg7[%c0_78, %c0_79], %75 {strides = array<i32>} : memref<4x1024xf32, #tpu.memory_space<vmem>>, vector<4x512xf32>,
      %cst_80 = arith.constant 0.000000e+00 : f32
      %77 = vector.broadcast %cst_80 : f32 to vector<20x512xf32>
      %c108 = arith.constant 108 : index
      %c0_81 = arith.constant 0 : index
      %78 = vector.load %arg8[%c108, %c0_81] : memref<128x512xf32, #tpu.memory_space<vmem>>, vector<20x512xf32>
      tpu.vector_store %arg8[%c108, %c0_81], %77 {strides = array<i32>} : memref<128x512xf32, #tpu.memory_space<vmem>>, vector<20x512xf32>,
    } else {
    }
    %c0_i32_1 = arith.constant 0 : i32
    %3 = arith.cmpi sgt, %arg1, %c0_i32_1 : i32
    %4 = arith.extui %3 : i1 to i32
    %c0_i32_2 = arith.constant 0 : i32
    %5 = arith.cmpi ne, %4, %c0_i32_2 : i32
    scf.if %5 {
      %c0_75 = arith.constant 0 : index
      %c512_76 = arith.constant 512 : index
      %74 = vector.load %arg7[%c0_75, %c512_76] : memref<4x1024xf32, #tpu.memory_space<vmem>>, vector<4x512xf32>
      %c0_77 = arith.constant 0 : index
      %c0_78 = arith.constant 0 : index
      %75 = vector.load %arg7[%c0_77, %c0_78] : memref<4x1024xf32, #tpu.memory_space<vmem>>, vector<4x512xf32>
      tpu.vector_store %arg7[%c0_77, %c0_78], %74 {strides = array<i32>} : memref<4x1024xf32, #tpu.memory_space<vmem>>, vector<4x512xf32>,
    } else {
    }
    %c0 = arith.constant 0 : index
    %c0_3 = arith.constant 0 : index
    %c0_4 = arith.constant 0 : index
    %6 = vector.load %arg3[%c0, %c0_3, %c0_4] : memref<1x4x512xf32, #tpu.memory_space<vmem>>, vector<1x4x512xf32>
    %7 = vector.shape_cast %6 : vector<1x4x512xf32> to vector<4x512xf32>
    %c0_5 = arith.constant 0 : index
    %c512 = arith.constant 512 : index
    %8 = vector.load %arg7[%c0_5, %c512] : memref<4x1024xf32, #tpu.memory_space<vmem>>, vector<4x512xf32>
    tpu.vector_store %arg7[%c0_5, %c512], %7 {strides = array<i32>} : memref<4x1024xf32, #tpu.memory_space<vmem>>, vector<4x512xf32>,
    %c0_6 = arith.constant 0 : index
    %c0_7 = arith.constant 0 : index
    %9 = vector.load %arg7[%c0_6, %c0_7] : memref<4x1024xf32, #tpu.memory_space<vmem>>, vector<4x512xf32>
    %c0_8 = arith.constant 0 : index
    %c0_9 = arith.constant 0 : index
    %10 = vector.load %arg8[%c0_8, %c0_9] : memref<128x512xf32, #tpu.memory_space<vmem>>, vector<4x512xf32>
    tpu.vector_store %arg8[%c0_8, %c0_9], %9 {strides = array<i32>} : memref<128x512xf32, #tpu.memory_space<vmem>>, vector<4x512xf32>,
    %c0_10 = arith.constant 0 : index
    %c1 = arith.constant 1 : index
    %11 = vector.load %arg7[%c0_10, %c1] : memref<4x1024xf32, #tpu.memory_space<vmem>>, vector<4x512xf32>
    %c4 = arith.constant 4 : index
    %c0_11 = arith.constant 0 : index
    %12 = vector.load %arg8[%c4, %c0_11] : memref<128x512xf32, #tpu.memory_space<vmem>>, vector<4x512xf32>
    tpu.vector_store %arg8[%c4, %c0_11], %11 {strides = array<i32>} : memref<128x512xf32, #tpu.memory_space<vmem>>, vector<4x512xf32>,
    %c0_12 = arith.constant 0 : index
    %c2 = arith.constant 2 : index
    %13 = vector.load %arg7[%c0_12, %c2] : memref<4x1024xf32, #tpu.memory_space<vmem>>, vector<4x512xf32>
    %c8 = arith.constant 8 : index
    %c0_13 = arith.constant 0 : index
    %14 = vector.load %arg8[%c8, %c0_13] : memref<128x512xf32, #tpu.memory_space<vmem>>, vector<4x512xf32>
    tpu.vector_store %arg8[%c8, %c0_13], %13 {strides = array<i32>} : memref<128x512xf32, #tpu.memory_space<vmem>>, vector<4x512xf32>,
    %c0_14 = arith.constant 0 : index
    %c10 = arith.constant 10 : index
    %15 = vector.load %arg7[%c0_14, %c10] : memref<4x1024xf32, #tpu.memory_space<vmem>>, vector<4x512xf32>
    %c12 = arith.constant 12 : index
    %c0_15 = arith.constant 0 : index
    %16 = vector.load %arg8[%c12, %c0_15] : memref<128x512xf32, #tpu.memory_space<vmem>>, vector<4x512xf32>
    tpu.vector_store %arg8[%c12, %c0_15], %15 {strides = array<i32>} : memref<128x512xf32, #tpu.memory_space<vmem>>, vector<4x512xf32>,
    %c0_16 = arith.constant 0 : index
    %c11 = arith.constant 11 : index
    %17 = vector.load %arg7[%c0_16, %c11] : memref<4x1024xf32, #tpu.memory_space<vmem>>, vector<4x512xf32>
    %c16 = arith.constant 16 : index
    %c0_17 = arith.constant 0 : index
    %18 = vector.load %arg8[%c16, %c0_17] : memref<128x512xf32, #tpu.memory_space<vmem>>, vector<4x512xf32>
    tpu.vector_store %arg8[%c16, %c0_17], %17 {strides = array<i32>} : memref<128x512xf32, #tpu.memory_space<vmem>>, vector<4x512xf32>,
    %c0_18 = arith.constant 0 : index
    %c12_19 = arith.constant 12 : index
    %19 = vector.load %arg7[%c0_18, %c12_19] : memref<4x1024xf32, #tpu.memory_space<vmem>>, vector<4x512xf32>
    %c20 = arith.constant 20 : index
    %c0_20 = arith.constant 0 : index
    %20 = vector.load %arg8[%c20, %c0_20] : memref<128x512xf32, #tpu.memory_space<vmem>>, vector<4x512xf32>
    tpu.vector_store %arg8[%c20, %c0_20], %19 {strides = array<i32>} : memref<128x512xf32, #tpu.memory_space<vmem>>, vector<4x512xf32>,
    %c0_21 = arith.constant 0 : index
    %c20_22 = arith.constant 20 : index
    %21 = vector.load %arg7[%c0_21, %c20_22] : memref<4x1024xf32, #tpu.memory_space<vmem>>, vector<4x512xf32>
    %c24 = arith.constant 24 : index
    %c0_23 = arith.constant 0 : index
    %22 = vector.load %arg8[%c24, %c0_23] : memref<128x512xf32, #tpu.memory_space<vmem>>, vector<4x512xf32>
    tpu.vector_store %arg8[%c24, %c0_23], %21 {strides = array<i32>} : memref<128x512xf32, #tpu.memory_space<vmem>>, vector<4x512xf32>,
    %c0_24 = arith.constant 0 : index
    %c21 = arith.constant 21 : index
    %23 = vector.load %arg7[%c0_24, %c21] : memref<4x1024xf32, #tpu.memory_space<vmem>>, vector<4x512xf32>
    %c28 = arith.constant 28 : index
    %c0_25 = arith.constant 0 : index
    %24 = vector.load %arg8[%c28, %c0_25] : memref<128x512xf32, #tpu.memory_space<vmem>>, vector<4x512xf32>
    tpu.vector_store %arg8[%c28, %c0_25], %23 {strides = array<i32>} : memref<128x512xf32, #tpu.memory_space<vmem>>, vector<4x512xf32>,
    %c0_26 = arith.constant 0 : index
    %c22 = arith.constant 22 : index
    %25 = vector.load %arg7[%c0_26, %c22] : memref<4x1024xf32, #tpu.memory_space<vmem>>, vector<4x512xf32>
    %c32 = arith.constant 32 : index
    %c0_27 = arith.constant 0 : index
    %26 = vector.load %arg8[%c32, %c0_27] : memref<128x512xf32, #tpu.memory_space<vmem>>, vector<4x512xf32>
    tpu.vector_store %arg8[%c32, %c0_27], %25 {strides = array<i32>} : memref<128x512xf32, #tpu.memory_space<vmem>>, vector<4x512xf32>,
    %c0_28 = arith.constant 0 : index
    %c100 = arith.constant 100 : index
    %27 = vector.load %arg7[%c0_28, %c100] : memref<4x1024xf32, #tpu.memory_space<vmem>>, vector<4x512xf32>
    %c36 = arith.constant 36 : index
    %c0_29 = arith.constant 0 : index
    %28 = vector.load %arg8[%c36, %c0_29] : memref<128x512xf32, #tpu.memory_space<vmem>>, vector<4x512xf32>
    tpu.vector_store %arg8[%c36, %c0_29], %27 {strides = array<i32>} : memref<128x512xf32, #tpu.memory_space<vmem>>, vector<4x512xf32>,
    %c0_30 = arith.constant 0 : index
    %c101 = arith.constant 101 : index
    %29 = vector.load %arg7[%c0_30, %c101] : memref<4x1024xf32, #tpu.memory_space<vmem>>, vector<4x512xf32>
    %c40 = arith.constant 40 : index
    %c0_31 = arith.constant 0 : index
    %30 = vector.load %arg8[%c40, %c0_31] : memref<128x512xf32, #tpu.memory_space<vmem>>, vector<4x512xf32>
    tpu.vector_store %arg8[%c40, %c0_31], %29 {strides = array<i32>} : memref<128x512xf32, #tpu.memory_space<vmem>>, vector<4x512xf32>,
    %c0_32 = arith.constant 0 : index
    %c102 = arith.constant 102 : index
    %31 = vector.load %arg7[%c0_32, %c102] : memref<4x1024xf32, #tpu.memory_space<vmem>>, vector<4x512xf32>
    %c44 = arith.constant 44 : index
    %c0_33 = arith.constant 0 : index
    %32 = vector.load %arg8[%c44, %c0_33] : memref<128x512xf32, #tpu.memory_space<vmem>>, vector<4x512xf32>
    tpu.vector_store %arg8[%c44, %c0_33], %31 {strides = array<i32>} : memref<128x512xf32, #tpu.memory_space<vmem>>, vector<4x512xf32>,
    %c0_34 = arith.constant 0 : index
    %c110 = arith.constant 110 : index
    %33 = vector.load %arg7[%c0_34, %c110] : memref<4x1024xf32, #tpu.memory_space<vmem>>, vector<4x512xf32>
    %c48 = arith.constant 48 : index
    %c0_35 = arith.constant 0 : index
    %34 = vector.load %arg8[%c48, %c0_35] : memref<128x512xf32, #tpu.memory_space<vmem>>, vector<4x512xf32>
    tpu.vector_store %arg8[%c48, %c0_35], %33 {strides = array<i32>} : memref<128x512xf32, #tpu.memory_space<vmem>>, vector<4x512xf32>,
    %c0_36 = arith.constant 0 : index
    %c111 = arith.constant 111 : index
    %35 = vector.load %arg7[%c0_36, %c111] : memref<4x1024xf32, #tpu.memory_space<vmem>>, vector<4x512xf32>
    %c52 = arith.constant 52 : index
    %c0_37 = arith.constant 0 : index
    %36 = vector.load %arg8[%c52, %c0_37] : memref<128x512xf32, #tpu.memory_space<vmem>>, vector<4x512xf32>
    tpu.vector_store %arg8[%c52, %c0_37], %35 {strides = array<i32>} : memref<128x512xf32, #tpu.memory_space<vmem>>, vector<4x512xf32>,
    %c0_38 = arith.constant 0 : index
    %c112 = arith.constant 112 : index
    %37 = vector.load %arg7[%c0_38, %c112] : memref<4x1024xf32, #tpu.memory_space<vmem>>, vector<4x512xf32>
    %c56 = arith.constant 56 : index
    %c0_39 = arith.constant 0 : index
    %38 = vector.load %arg8[%c56, %c0_39] : memref<128x512xf32, #tpu.memory_space<vmem>>, vector<4x512xf32>
    tpu.vector_store %arg8[%c56, %c0_39], %37 {strides = array<i32>} : memref<128x512xf32, #tpu.memory_space<vmem>>, vector<4x512xf32>,
    %c0_40 = arith.constant 0 : index
    %c120 = arith.constant 120 : index
    %39 = vector.load %arg7[%c0_40, %c120] : memref<4x1024xf32, #tpu.memory_space<vmem>>, vector<4x512xf32>
    %c60 = arith.constant 60 : index
    %c0_41 = arith.constant 0 : index
    %40 = vector.load %arg8[%c60, %c0_41] : memref<128x512xf32, #tpu.memory_space<vmem>>, vector<4x512xf32>
    tpu.vector_store %arg8[%c60, %c0_41], %39 {strides = array<i32>} : memref<128x512xf32, #tpu.memory_space<vmem>>, vector<4x512xf32>,
    %c0_42 = arith.constant 0 : index
    %c121 = arith.constant 121 : index
    %41 = vector.load %arg7[%c0_42, %c121] : memref<4x1024xf32, #tpu.memory_space<vmem>>, vector<4x512xf32>
    %c64 = arith.constant 64 : index
    %c0_43 = arith.constant 0 : index
    %42 = vector.load %arg8[%c64, %c0_43] : memref<128x512xf32, #tpu.memory_space<vmem>>, vector<4x512xf32>
    tpu.vector_store %arg8[%c64, %c0_43], %41 {strides = array<i32>} : memref<128x512xf32, #tpu.memory_space<vmem>>, vector<4x512xf32>,
    %c0_44 = arith.constant 0 : index
    %c122 = arith.constant 122 : index
    %43 = vector.load %arg7[%c0_44, %c122] : memref<4x1024xf32, #tpu.memory_space<vmem>>, vector<4x512xf32>
    %c68 = arith.constant 68 : index
    %c0_45 = arith.constant 0 : index
    %44 = vector.load %arg8[%c68, %c0_45] : memref<128x512xf32, #tpu.memory_space<vmem>>, vector<4x512xf32>
    tpu.vector_store %arg8[%c68, %c0_45], %43 {strides = array<i32>} : memref<128x512xf32, #tpu.memory_space<vmem>>, vector<4x512xf32>,
    %c0_46 = arith.constant 0 : index
    %c200 = arith.constant 200 : index
    %45 = vector.load %arg7[%c0_46, %c200] : memref<4x1024xf32, #tpu.memory_space<vmem>>, vector<4x512xf32>
    %c72 = arith.constant 72 : index
    %c0_47 = arith.constant 0 : index
    %46 = vector.load %arg8[%c72, %c0_47] : memref<128x512xf32, #tpu.memory_space<vmem>>, vector<4x512xf32>
    tpu.vector_store %arg8[%c72, %c0_47], %45 {strides = array<i32>} : memref<128x512xf32, #tpu.memory_space<vmem>>, vector<4x512xf32>,
    %c0_48 = arith.constant 0 : index
    %c201 = arith.constant 201 : index
    %47 = vector.load %arg7[%c0_48, %c201] : memref<4x1024xf32, #tpu.memory_space<vmem>>, vector<4x512xf32>
    %c76 = arith.constant 76 : index
    %c0_49 = arith.constant 0 : index
    %48 = vector.load %arg8[%c76, %c0_49] : memref<128x512xf32, #tpu.memory_space<vmem>>, vector<4x512xf32>
    tpu.vector_store %arg8[%c76, %c0_49], %47 {strides = array<i32>} : memref<128x512xf32, #tpu.memory_space<vmem>>, vector<4x512xf32>,
    %c0_50 = arith.constant 0 : index
    %c202 = arith.constant 202 : index
    %49 = vector.load %arg7[%c0_50, %c202] : memref<4x1024xf32, #tpu.memory_space<vmem>>, vector<4x512xf32>
    %c80 = arith.constant 80 : index
    %c0_51 = arith.constant 0 : index
    %50 = vector.load %arg8[%c80, %c0_51] : memref<128x512xf32, #tpu.memory_space<vmem>>, vector<4x512xf32>
    tpu.vector_store %arg8[%c80, %c0_51], %49 {strides = array<i32>} : memref<128x512xf32, #tpu.memory_space<vmem>>, vector<4x512xf32>,
    %c0_52 = arith.constant 0 : index
    %c210 = arith.constant 210 : index
    %51 = vector.load %arg7[%c0_52, %c210] : memref<4x1024xf32, #tpu.memory_space<vmem>>, vector<4x512xf32>
    %c84 = arith.constant 84 : index
    %c0_53 = arith.constant 0 : index
    %52 = vector.load %arg8[%c84, %c0_53] : memref<128x512xf32, #tpu.memory_space<vmem>>, vector<4x512xf32>
    tpu.vector_store %arg8[%c84, %c0_53], %51 {strides = array<i32>} : memref<128x512xf32, #tpu.memory_space<vmem>>, vector<4x512xf32>,
    %c0_54 = arith.constant 0 : index
    %c211 = arith.constant 211 : index
    %53 = vector.load %arg7[%c0_54, %c211] : memref<4x1024xf32, #tpu.memory_space<vmem>>, vector<4x512xf32>
    %c88 = arith.constant 88 : index
    %c0_55 = arith.constant 0 : index
    %54 = vector.load %arg8[%c88, %c0_55] : memref<128x512xf32, #tpu.memory_space<vmem>>, vector<4x512xf32>
    tpu.vector_store %arg8[%c88, %c0_55], %53 {strides = array<i32>} : memref<128x512xf32, #tpu.memory_space<vmem>>, vector<4x512xf32>,
    %c0_56 = arith.constant 0 : index
    %c212 = arith.constant 212 : index
    %55 = vector.load %arg7[%c0_56, %c212] : memref<4x1024xf32, #tpu.memory_space<vmem>>, vector<4x512xf32>
    %c92 = arith.constant 92 : index
    %c0_57 = arith.constant 0 : index
    %56 = vector.load %arg8[%c92, %c0_57] : memref<128x512xf32, #tpu.memory_space<vmem>>, vector<4x512xf32>
    tpu.vector_store %arg8[%c92, %c0_57], %55 {strides = array<i32>} : memref<128x512xf32, #tpu.memory_space<vmem>>, vector<4x512xf32>,
    %c0_58 = arith.constant 0 : index
    %c220 = arith.constant 220 : index
    %57 = vector.load %arg7[%c0_58, %c220] : memref<4x1024xf32, #tpu.memory_space<vmem>>, vector<4x512xf32>
    %c96 = arith.constant 96 : index
    %c0_59 = arith.constant 0 : index
    %58 = vector.load %arg8[%c96, %c0_59] : memref<128x512xf32, #tpu.memory_space<vmem>>, vector<4x512xf32>
    tpu.vector_store %arg8[%c96, %c0_59], %57 {strides = array<i32>} : memref<128x512xf32, #tpu.memory_space<vmem>>, vector<4x512xf32>,
    %c0_60 = arith.constant 0 : index
    %c221 = arith.constant 221 : index
    %59 = vector.load %arg7[%c0_60, %c221] : memref<4x1024xf32, #tpu.memory_space<vmem>>, vector<4x512xf32>
    %c100_61 = arith.constant 100 : index
    %c0_62 = arith.constant 0 : index
    %60 = vector.load %arg8[%c100_61, %c0_62] : memref<128x512xf32, #tpu.memory_space<vmem>>, vector<4x512xf32>
    tpu.vector_store %arg8[%c100_61, %c0_62], %59 {strides = array<i32>} : memref<128x512xf32, #tpu.memory_space<vmem>>, vector<4x512xf32>,
    %c0_63 = arith.constant 0 : index
    %c222 = arith.constant 222 : index
    %61 = vector.load %arg7[%c0_63, %c222] : memref<4x1024xf32, #tpu.memory_space<vmem>>, vector<4x512xf32>
    %c104 = arith.constant 104 : index
    %c0_64 = arith.constant 0 : index
    %62 = vector.load %arg8[%c104, %c0_64] : memref<128x512xf32, #tpu.memory_space<vmem>>, vector<4x512xf32>
    tpu.vector_store %arg8[%c104, %c0_64], %61 {strides = array<i32>} : memref<128x512xf32, #tpu.memory_space<vmem>>, vector<4x512xf32>,
    %c0_65 = arith.constant 0 : index
    %c0_66 = arith.constant 0 : index
    %63 = vector.load %arg4[%c0_65, %c0_66] : memref<8x128xf32, #tpu.memory_space<vmem>>, vector<8x128xf32>
    %c0_67 = arith.constant 0 : index
    %c0_68 = arith.constant 0 : index
    %64 = vector.load %arg8[%c0_67, %c0_68] : memref<128x512xf32, #tpu.memory_space<vmem>>, vector<128x512xf32>
    %cst = arith.constant dense<0.000000e+00> : vector<8x512xf32>
    %65 = tpu.matmul %63, %64, %cst {dimension_numbers = #tpu.dot_dimension_numbers<[1], [0], [0], [1], [0, 0, 1, 1], [], []>} : vector<8x128xf32>, vector<128x512xf32>, vector<8x512xf32> -> vector<8x512xf32>
    %c0_69 = arith.constant 0 : index
    %c0_70 = arith.constant 0 : index
    %66 = vector.load %arg5[%c0_69, %c0_70] : memref<8x1xf32, #tpu.memory_space<vmem>>, vector<8x1xf32>
    %67 = vector.broadcast %66 : vector<8x1xf32> to vector<8x512xf32>
    %68 = arith.addf %65, %67 : vector<8x512xf32>
    %cst_71 = arith.constant 0.000000e+00 : f32
    %69 = vector.broadcast %cst_71 : f32 to vector<8x512xf32>
    %70 = arith.maximumf %68, %69 : vector<8x512xf32>
    %c0_72 = arith.constant 0 : index
    %c0_73 = arith.constant 0 : index
    %c0_74 = arith.constant 0 : index
    %71 = vector.load %arg6[%c0_72, %c0_73, %c0_74] : memref<1x8x512xf32, #tpu.memory_space<vmem>>, vector<1x8x512xf32>
    %72 = vector.shape_cast %71 : vector<1x8x512xf32> to vector<8x512xf32>
    %73 = vector.shape_cast %70 : vector<8x512xf32> to vector<1x8x512xf32>
    tpu.vector_store %arg6[%c0_72, %c0_73, %c0_74], %73 {strides = array<i32>} : memref<1x8x512xf32, #tpu.memory_space<vmem>>, vector<1x8x512xf32>,
    return
  }
  func.func @transform_0(%arg0: i32, %arg1: i32) -> (i32, i32, i32) {
    %c0_i32 = arith.constant 0 : i32
    %c0_i32_0 = arith.constant 0 : i32
    %c0_i32_1 = arith.constant 0 : i32
    return %arg0, %c0_i32, %c0_i32_0 : i32, i32, i32
  }
  func.func @transform_1(%arg0: i32, %arg1: i32) -> (i32, i32, i32) {
    %c1_i32 = arith.constant 1 : i32
    %0 = arith.addi %arg1, %c1_i32 : i32
    %c0_i32 = arith.constant 0 : i32
    %c0_i32_0 = arith.constant 0 : i32
    return %arg0, %c0_i32, %0 : i32, i32, i32
  }
  func.func @transform_2(%arg0: i32, %arg1: i32) -> (i32, i32) {
    %c0_i32 = arith.constant 0 : i32
    %c0_i32_0 = arith.constant 0 : i32
    %c0_i32_1 = arith.constant 0 : i32
    return %c0_i32, %c0_i32_0 : i32, i32
  }
  func.func @transform_3(%arg0: i32, %arg1: i32) -> (i32, i32) {
    %c0_i32 = arith.constant 0 : i32
    %c0_i32_0 = arith.constant 0 : i32
    %c0_i32_1 = arith.constant 0 : i32
    return %c0_i32, %c0_i32_0 : i32, i32
  }
  func.func @transform_4(%arg0: i32, %arg1: i32) -> (i32, i32, i32) {
    %c0_i32 = arith.constant 0 : i32
    %c0_i32_0 = arith.constant 0 : i32
    return %arg0, %c0_i32, %arg1 : i32, i32, i32
  }
}

</mosaic_0001>

<llo_original>
// kernel: tpu_custom_call.1
$region0: #{tpu_custom_call.1}
  #allocation0 [shape = 'u32[]', space=smem, size = 0x4, offset = 0x4, fixed_abs, tag = 'smem constant byte address 0x4 - core index']
  #allocation1 [shape = 'u32[144,128]{1,0:T(1,128)}', space=vmem, size = 0x12000, scoped, tag = 'internal scratch']
  #allocation2 [shape = 'f32[4,1024]{1,0:T(4,128)}', space=vmem, size = 0x4000, scoped, tag = 'scratch operand']
  #allocation3 [shape = 'f32[128,512]{1,0:T(8,128)}', space=vmem, size = 0x40000, scoped, tag = 'scratch operand']
  %s0 = inlined_call_operand.hbm [shape: f32[2,4,1536], index: 0, kind: input, shape index: {}]
  %s1 = inlined_call_operand.hbm [shape: f32[2,4,1536], index: 1, kind: input, shape index: {}]
  %s2 = inlined_call_operand.vmem [shape: f32[8,128], index: 2, kind: input, shape index: {}]
  %s3 = inlined_call_operand.vmem [shape: f32[8,1], index: 3, kind: input, shape index: {}]
  %s4 = inlined_call_operand.hbm [shape: f32[2,8,1024], index: 4, kind: output, shape index: {}]
  %s5 = sld [smem:[#allocation0]]
  $region65: #{tpu_custom_call.1} parent=0
    _
  %s7 = ssub.s32 1, %s5
  %s8 = scalar_select 0, %s7, %s5
  $region1: #{tpu_custom_call.1} parent=0
    #allocation4 [shape = 'u8[16384]{0}', space=vmem, size = 0x4000, scoped, tag = 'input window, operand 0']
    #allocation5 [shape = 's32[2]{0}', space=sflag, size = 0x8, scoped, tag = 'scoped memory for tpu_custom_call.1']
    #allocation6 [shape = 's32[2]{0}', space=sflag, size = 0x8, scoped, tag = 'scoped memory for tpu_custom_call.1']
    #allocation7 [shape = 'u8[16384]{0}', space=vmem, size = 0x4000, scoped, tag = 'input window, operand 1']
    #allocation8 [shape = 's32[2]{0}', space=sflag, size = 0x8, scoped, tag = 'scoped memory for tpu_custom_call.1']
    #allocation9 [shape = 'u8[32768]{0}', space=vmem, size = 0x8000, scoped, tag = 'output window, operand 0']
    %9 = vsyncpa [#allocation5], 0
    %s10 = scalar_lea.sflag [#allocation5], 1
    %11 = vsyncpa %s10, 0
    %12 = vsyncpa [#allocation8], 0
    %s13 = scalar_lea.sflag [#allocation8], 1
    %14 = vsyncpa %s13, 0
    %15 = vsyncpa [#allocation6], 0
    %s16 = scalar_lea.sflag [#allocation6], 1
    %17 = vsyncpa %s16, 0
    loop: start=0, step=1, limit=6
    $region2: #{tpu_custom_call.1} parent=1 // loop_pre_header
      _
    $region3: #{tpu_custom_call.1} parent=1 // loop_header
      %s19 = sphi 0, %s23
      %p20 = scmp.ge.s32.totalorder %s19, 6
      %s26 = sphi 0, %s38
      %s27 = sphi 0, %s34
      %s28 = sphi 0, %s26
      %s29 = sphi 0, %s27
      %s30 = sphi 0, %s28
      %s31 = sphi 0, %s29
      %s41 = sphi 0, %s43
      %s44 = sphi 0, %s41
      %s45 = sphi 0, %s44
      %s61 = sphi 0, %s45
      %s71 = sphi 0, %s73
      %s74 = sphi 0, %s71
      %s75 = sphi 0, %s74
      %s91 = sphi 0, %s75
      %s95 = sphi 0, %s95
      %s97 = sphi 0, %s95
      %s98 = sphi 0, %s97
      %s112 = sphi 0, %s98
      %s116 = sphi 0, %s116
      %s118 = sphi 0, %s116
      %s119 = sphi 0, %s118
      %s133 = sphi 0, %s119
      %s141 = sphi 0, %s143
      %s144 = sphi 0, %s141
      %s145 = sphi 0, %s144
      %s161 = sphi 0, %s145
    $region4: #{tpu_custom_call.1} parent=1 // loop_header_branch
      %22 = sbr.rel (%p20) target = $region8
    $region5: #{tpu_custom_call.1} parent=1 // loop_body
      %s24 = ssub.s32 %s19, 1
      %s25 = ssub.s32 %s19, 2
      %s32 = sadd.s32 1, %s27
      %p33 = scmp.ge.s32.totalorder %s32, 2
      %s34 = scalar_select %p33, 0, %s32
      %s35 = sadd.s32 1, %s26
      %s36 = scalar_select %p33, %s35, %s26
      %p37 = scmp.ge.s32.totalorder %s36, 2
      %s38 = scalar_select %p37, 0, %s36
      %s39 = ssub.s32 %s26, %s38
      %p40 = scmp.eq.s32.totalorder %s39, 0
      %s42 = sadd.s32 %s41, 1
      %s43 = scalar_select %p40, %s41, %s42
      %p46 = pneg %p40
      %p47 = scmp.eq.s32.totalorder %s19, 3
      %p48 = por %p46, %p47
      %p49 = scmp.ne.s32.totalorder %s41, %s44
      %p50 = scmp.eq.s32.totalorder %s19, 0
      %p51 = por %p49, %p50
      %p52 = scmp.ne.s32.totalorder %s41, %s44
      %p53 = scmp.eq.s32.totalorder %s24, 3
      %p54 = por %p52, %p53
      %p55 = scmp.ne.s32.totalorder %s44, %s45
      %p56 = scmp.eq.s32.totalorder %s24, 0
      %p57 = por %p55, %p56
      %p58 = scmp.ne.s32.totalorder %s44, %s45
      %p59 = scmp.eq.s32.totalorder %s25, 3
      %p60 = por %p58, %p59
      %p62 = scmp.ne.s32.totalorder %s45, %s61
      %p63 = scmp.eq.s32.totalorder %s25, 0
      %p64 = por %p62, %p63
      %s65 = sadd.s32 %s27, 1
      %s66 = sadd.s32 %s34, 1
      %s67 = ssub.s32 %s26, %s38
      %s68 = ssub.s32 %s65, %s66
      %s69 = sor.u32 %s67, %s68
      %p70 = scmp.eq.s32.totalorder %s69, 0
      %s72 = sadd.s32 %s71, 1
      %s73 = scalar_select %p70, %s71, %s72
      %p76 = pneg %p70
      %p77 = scmp.eq.s32.totalorder %s19, 3
      %p78 = por %p76, %p77
      %p79 = scmp.ne.s32.totalorder %s71, %s74
      %p80 = scmp.eq.s32.totalorder %s19, 0
      %p81 = por %p79, %p80
      %p82 = scmp.ne.s32.totalorder %s71, %s74
      %p83 = scmp.eq.s32.totalorder %s24, 3
      %p84 = por %p82, %p83
      %p85 = scmp.ne.s32.totalorder %s74, %s75
      %p86 = scmp.eq.s32.totalorder %s24, 0
      %p87 = por %p85, %p86
      %p88 = scmp.ne.s32.totalorder %s74, %s75
      %p89 = scmp.eq.s32.totalorder %s25, 3
      %p90 = por %p88, %p89
      %p92 = scmp.ne.s32.totalorder %s75, %s91
      %p93 = scmp.eq.s32.totalorder %s25, 0
      %p94 = por %p92, %p93
      %s96 = sadd.s32 %s95, 1
      %p99 = scmp.eq.s32.totalorder %s19, 3
      %p100 = scmp.ne.s32.totalorder %s95, %s97
      %p101 = scmp.eq.s32.totalorder %s19, 0
      %p102 = por %p100, %p101
      %p103 = scmp.ne.s32.totalorder %s95, %s97
      %p104 = scmp.eq.s32.totalorder %s24, 3
      %p105 = por %p103, %p104
      %p106 = scmp.ne.s32.totalorder %s97, %s98
      %p107 = scmp.eq.s32.totalorder %s24, 0
      %p108 = por %p106, %p107
      %p109 = scmp.ne.s32.totalorder %s97, %s98
      %p110 = scmp.eq.s32.totalorder %s25, 3
      %p111 = por %p109, %p110
      %p113 = scmp.ne.s32.totalorder %s98, %s112
      %p114 = scmp.eq.s32.totalorder %s25, 0
      %p115 = por %p113, %p114
      %s117 = sadd.s32 %s116, 1
      %p120 = scmp.eq.s32.totalorder %s19, 3
      %p121 = scmp.ne.s32.totalorder %s116, %s118
      %p122 = scmp.eq.s32.totalorder %s19, 0
      %p123 = por %p121, %p122
      %p124 = scmp.ne.s32.totalorder %s116, %s118
      %p125 = scmp.eq.s32.totalorder %s24, 3
      %p126 = por %p124, %p125
      %p127 = scmp.ne.s32.totalorder %s118, %s119
      %p128 = scmp.eq.s32.totalorder %s24, 0
      %p129 = por %p127, %p128
      %p130 = scmp.ne.s32.totalorder %s118, %s119
      %p131 = scmp.eq.s32.totalorder %s25, 3
      %p132 = por %p130, %p131
      %p134 = scmp.ne.s32.totalorder %s119, %s133
      %p135 = scmp.eq.s32.totalorder %s25, 0
      %p136 = por %p134, %p135
      %s137 = ssub.s32 %s26, %s38
      %s138 = ssub.s32 %s27, %s34
      %s139 = sor.u32 %s137, %s138
      %p140 = scmp.eq.s32.totalorder %s139, 0
      %s142 = sadd.s32 %s141, 1
      %s143 = scalar_select %p140, %s141, %s142
      %p146 = pneg %p140
      %p147 = scmp.eq.s32.totalorder %s19, 3
      %p148 = por %p146, %p147
      %p149 = scmp.ne.s32.totalorder %s141, %s144
      %p150 = scmp.eq.s32.totalorder %s19, 0
      %p151 = por %p149, %p150
      %p152 = scmp.ne.s32.totalorder %s141, %s144
      %p153 = scmp.eq.s32.totalorder %s24, 3
      %p154 = por %p152, %p153
      %p155 = scmp.ne.s32.totalorder %s144, %s145
      %p156 = scmp.eq.s32.totalorder %s24, 0
      %p157 = por %p155, %p156
      %p158 = scmp.ne.s32.totalorder %s144, %s145
      %p159 = scmp.eq.s32.totalorder %s25, 3
      %p160 = por %p158, %p159
      %p162 = scmp.ne.s32.totalorder %s145, %s161
      %p163 = scmp.eq.s32.totalorder %s25, 0
      %p164 = por %p162, %p163
      %p165 = scmp.le.s32.totalorder 1, %s19
      %p166 = scmp.lt.s32.totalorder %s19, 5
      %p167 = pnand %p165, %p166
      %p168 = pneg %p167
      // Predicated region
      $region9: #{tpu_custom_call.1} parent=5 // pred_check
        _
      $region10: #{tpu_custom_call.1} parent=5 // pred_check_branch
        %170 = sbr.rel (%p167) target = $region12
      $region11: #{tpu_custom_call.1} parent=5 // pred_region
        %s171 = ssub.s32 %s19, 1
        // Predicated region
        $region13: #{tpu_custom_call.1} parent=11 // pred_check
          %p172 = pneg %p108
        $region14: #{tpu_custom_call.1} parent=11 // pred_check_branch
          %174 = sbr.rel (%p172) target = $region16
        $region15: #{tpu_custom_call.1} parent=11 // pred_region
          _
        $region16: #{tpu_custom_call.1} parent=11 // pred_fallthru
          _
        // Predicated region
        $region17: #{tpu_custom_call.1} parent=11 // pred_check
          %p175 = pneg %p129
        $region18: #{tpu_custom_call.1} parent=11 // pred_check_branch
          %177 = sbr.rel (%p175) target = $region20
        $region19: #{tpu_custom_call.1} parent=11 // pred_region
          _
        $region20: #{tpu_custom_call.1} parent=11 // pred_fallthru
          _
      $region12: #{tpu_custom_call.1} parent=5 // pred_fallthru
        _
      %p178 = scmp.lt.s32.totalorder %s19, 4
      // Predicated region
      $region21: #{tpu_custom_call.1} parent=5 // pred_check
        %p179 = pneg %p178
      $region22: #{tpu_custom_call.1} parent=5 // pred_check_branch
        %181 = sbr.rel (%p179) target = $region24
      $region23: #{tpu_custom_call.1} parent=5 // pred_region
        // Predicated region
        $region25: #{tpu_custom_call.1} parent=23 // pred_check
          %p182 = pneg %p51
        $region26: #{tpu_custom_call.1} parent=23 // pred_check_branch
          %184 = sbr.rel (%p182) target = $region28
        $region27: #{tpu_custom_call.1} parent=23 // pred_region
          %s185 = sand.u32 %s41, 1
          %s186 = scalar_lea.sflag [#allocation5], %s185
          %s187 = sand.u32 %s41, 1
          %s188 = smul.addr %s187, 16
          %s189 = scalar_lea.vmem [#allocation4], %s188
          %s191 = ssub.s32 256, 256
          %192 = vsyncadd %s186, %s191
          %s193 = smul.addr %s26, 12
          %s194 = smul.addr %s193, 64
          %s195 = scalar_lea.hbm %s0, %s194
          %s197 = sshll.u32 %s189, 4
          %s198 = int_to_ptr.vmem [resolvable:$true] %s197
          %200 = dma.hbm_to_vmem [thread:$0]  %s195, 256, %s198, %s186
        $region28: #{tpu_custom_call.1} parent=23 // pred_fallthru
          _
        // Predicated region
        $region29: #{tpu_custom_call.1} parent=23 // pred_check
          %p201 = pneg %p81
        $region30: #{tpu_custom_call.1} parent=23 // pred_check_branch
          %203 = sbr.rel (%p201) target = $region32
        $region31: #{tpu_custom_call.1} parent=23 // pred_region
          %s204 = sand.u32 %s71, 1
          %s205 = scalar_lea.sflag [#allocation8], %s204
          %s206 = sand.u32 %s71, 1
          %s207 = smul.addr %s206, 16
          %s208 = scalar_lea.vmem [#allocation7], %s207
          %s209 = sadd.s32 %s27, 1
          %s210 = smul.u32 4, %s209
          %s212 = ssub.s32 256, 256
          %213 = vsyncadd %s205, %s212
          %s214 = smul.addr %s26, 12
          %s215 = sadd.s32 %s210, %s214
          %s216 = smul.addr %s215, 64
          %s217 = scalar_lea.hbm %s1, %s216
          %s219 = sshll.u32 %s208, 4
          %s220 = int_to_ptr.vmem [resolvable:$true] %s219
          %222 = dma.hbm_to_vmem [thread:$0]  %s217, 256, %s220, %s205
        $region32: #{tpu_custom_call.1} parent=23 // pred_fallthru
          _
      $region24: #{tpu_custom_call.1} parent=5 // pred_fallthru
        _
      %p223 = scmp.le.s32.totalorder 1, %s19
      %p224 = scmp.lt.s32.totalorder %s19, 5
      %p225 = pnand %p223, %p224
      %p226 = pneg %p225
      // Predicated region
      $region33: #{tpu_custom_call.1} parent=5 // pred_check
        _
      $region34: #{tpu_custom_call.1} parent=5 // pred_check_branch
        %228 = sbr.rel (%p225) target = $region36
      $region35: #{tpu_custom_call.1} parent=5 // pred_region
        %s229 = ssub.s32 %s19, 1
        %s230 = sand.u32 %s44, 1
        %s231 = scalar_lea.sflag [#allocation5], %s230
        %s232 = sand.u32 %s44, 1
        %s233 = smul.addr %s232, 16
        %s234 = scalar_lea.vmem [#allocation4], %s233
        // Predicated region
        $region37: #{tpu_custom_call.1} parent=35 // pred_check
          %p235 = pneg %p57
        $region38: #{tpu_custom_call.1} parent=35 // pred_check_branch
          %237 = sbr.rel (%p235) target = $region40
        $region39: #{tpu_custom_call.1} parent=35 // pred_region
          %238 = dma.done %s231, 256
        $region40: #{tpu_custom_call.1} parent=35 // pred_fallthru
          _
        %s239 = sand.u32 %s74, 1
        %s240 = scalar_lea.sflag [#allocation8], %s239
        %s241 = sand.u32 %s74, 1
        %s242 = smul.addr %s241, 16
        %s243 = scalar_lea.vmem [#allocation7], %s242
        // Predicated region
        $region41: #{tpu_custom_call.1} parent=35 // pred_check
          %p244 = pneg %p87
        $region42: #{tpu_custom_call.1} parent=35 // pred_check_branch
          %246 = sbr.rel (%p244) target = $region44
        $region43: #{tpu_custom_call.1} parent=35 // pred_region
          %247 = dma.done %s240, 256
        $region44: #{tpu_custom_call.1} parent=35 // pred_fallthru
          _
        %s248 = sand.u32 %s44, 1
        %s249 = scalar_lea.sflag [#allocation5], %s248
        %s250 = sand.u32 %s44, 1
        %s251 = smul.addr %s250, 16
        %s252 = scalar_lea.vmem [#allocation4], %s251
        %p253 = pneg %p57
        %p254 = pneg %p54
        %s255 = sand.u32 %s74, 1
        %s256 = scalar_lea.sflag [#allocation8], %s255
        %s257 = sand.u32 %s74, 1
        %s258 = smul.addr %s257, 16
        %s259 = scalar_lea.vmem [#allocation7], %s258
        %p260 = pneg %p87
        %p261 = pneg %p84
        %p262 = pneg %p108
        %p263 = pneg %p105
        %p264 = pneg %p129
        %p265 = pneg %p126
        %p266 = pneg %p157
        %p267 = pneg %p154
        %s268 = sand.u32 %s144, 1
        %s269 = scalar_lea.sflag [#allocation6], %s268
        %s270 = sand.u32 %s144, 1
        %s271 = smul.addr %s270, 32
        %s272 = scalar_lea.vmem [#allocation9], %s271
        %s273 = sadd.s32 %s29, 1
        %s274 = smul.u32 4, %s273
        %s275 = smul.u32 4, %s29
        %p276 = scmp.eq.s32.totalorder %s29, 0
        // Predicated region
        $region45: #{tpu_custom_call.1} parent=35 // pred_check
          %p277 = pneg %p276
        $region46: #{tpu_custom_call.1} parent=35 // pred_check_branch
          %279 = sbr.rel (%p277) target = $region48
        $region47: #{tpu_custom_call.1} parent=35 // pred_region
          %v280 = vld [vmem:[%s234] sm:$0xff]
          %v281 = vld [vmem:[%s234 + $0x8] sm:$0xff]
          %282 = vst [vmem:[#allocation2] sm:$0xff] %v280
          %283 = vst [vmem:[#allocation2 + $0x8] sm:$0xff] %v281
          %284 = vst [vmem:[#allocation3 + $0x1a0] sm:$0xf0] 0.0
          %285 = vst [vmem:[#allocation3 + $0x1a8] sm:$0xf0] 0.0
          %286 = vst [vmem:[#allocation3 + $0x1b0] sm:$0xf0] 0.0
          %287 = vst [vmem:[#allocation3 + $0x1b8] sm:$0xf0] 0.0
          %288 = vst [vmem:[#allocation3 + $0x1c0] sm:$0xff] 0.0
          %289 = vst [vmem:[#allocation3 + $0x1c8] sm:$0xff] 0.0
          %290 = vst [vmem:[#allocation3 + $0x1d0] sm:$0xff] 0.0
          %291 = vst [vmem:[#allocation3 + $0x1d8] sm:$0xff] 0.0
          %292 = vst [vmem:[#allocation3 + $0x1e0] sm:$0xff] 0.0
          %293 = vst [vmem:[#allocation3 + $0x1e8] sm:$0xff] 0.0
          %294 = vst [vmem:[#allocation3 + $0x1f0] sm:$0xff] 0.0
          %295 = vst [vmem:[#allocation3 + $0x1f8] sm:$0xff] 0.0
        $region48: #{tpu_custom_call.1} parent=35 // pred_fallthru
          _
        %p296 = scmp.gt.s32.totalorder %s29, 0
        // Predicated region
        $region49: #{tpu_custom_call.1} parent=35 // pred_check
          %p297 = pneg %p296
        $region50: #{tpu_custom_call.1} parent=35 // pred_check_branch
          %299 = sbr.rel (%p297) target = $region52
        $region51: #{tpu_custom_call.1} parent=35 // pred_region
          %v300 = vld [vmem:[#allocation2 + $0x10] sm:$0xff]
          %v301 = vld [vmem:[#allocation2 + $0x18] sm:$0xff]
          %302 = vst [vmem:[#allocation2] sm:$0xff] %v300
          %303 = vst [vmem:[#allocation2 + $0x8] sm:$0xff] %v301
        $region52: #{tpu_custom_call.1} parent=35 // pred_fallthru
          _
        %v304 = vld [vmem:[%s243] sm:$0xff]
        %v305 = vld [vmem:[%s243 + $0x8] sm:$0xff]
        %306 = vst [vmem:[#allocation2 + $0x10] sm:$0xff] %v304
        %307 = vst [vmem:[#allocation2 + $0x18] sm:$0xff] %v305
        %v308 = vld [vmem:[#allocation2] sm:$0xff]
        %v309 = vld [vmem:[#allocation2 + $0x8] sm:$0xff]
        %v312 = vcombine.high %v308, %v308
        %v313 = vcombine.high %v309, %v309
        %316 = vst [vmem:[#allocation3] sm:$0xf] %v308
        %317 = vst [vmem:[#allocation3 + $0x8] sm:$0xf] %v312
        %318 = vst [vmem:[#allocation3 + $0x10] sm:$0xf] %v309
        %319 = vst [vmem:[#allocation3 + $0x18] sm:$0xf] %v313
        %v320 = vld [vmem:[#allocation2] sm:$0xff]
        %v321 = vld [vmem:[#allocation2 + $0x8] sm:$0xff]
        %v322 = vld [vmem:[#allocation2 + $0x10] sm:$0xf]
        %v326 = vcombine.low %v320, %v320
        %v327 = vcombine.low %v321, %v321
        %v328 = vcombine.low %v322, %v322
        %329 = vrot.lane.b32.xlu0 %v326, 127
        %v330 = vpop.permute.xlu0 %329
        %331 = vrot.lane.b32.xlu0 %v320, 127
        %v332 = vpop.permute.xlu0 %331
        %333 = vrot.lane.b32.xlu0 %v327, 127
        %v334 = vpop.permute.xlu0 %333
        %335 = vrot.lane.b32.xlu0 %v321, 127
        %v336 = vpop.permute.xlu0 %335
        %337 = vrot.lane.b32.xlu0 %v328, 127
        %v338 = vpop.permute.xlu0 %337
        %vm339 = vcmask 1039360
        %v340 = vsel %vm339, %v330, %v332
        %v341 = vsel %vm339, %v332, %v334
        %v342 = vsel %vm339, %v334, %v336
        %v343 = vsel %vm339, %v336, %v338
        %348 = vst [vmem:[#allocation3] sm:$0xf0] %v340
        %349 = vst [vmem:[#allocation3 + $0x8] sm:$0xf0] %v341
        %350 = vst [vmem:[#allocation3 + $0x10] sm:$0xf0] %v342
        %351 = vst [vmem:[#allocation3 + $0x18] sm:$0xf0] %v343
        %v352 = vld [vmem:[#allocation2] sm:$0xff]
        %v353 = vld [vmem:[#allocation2 + $0x8] sm:$0xff]
        %v354 = vld [vmem:[#allocation2 + $0x10] sm:$0xf]
        %v358 = vcombine.high %v352, %v352
        %v359 = vcombine.high %v353, %v353
        %360 = vrot.lane.b32.xlu0 %v352, 126
        %v361 = vpop.permute.xlu0 %360
        %362 = vrot.lane.b32.xlu0 %v358, 126
        %v363 = vpop.permute.xlu0 %362
        %364 = vrot.lane.b32.xlu0 %v353, 126
        %v365 = vpop.permute.xlu0 %364
        %366 = vrot.lane.b32.xlu0 %v359, 126
        %v367 = vpop.permute.xlu0 %366
        %368 = vrot.lane.b32.xlu0 %v354, 126
        %v369 = vpop.permute.xlu0 %368
        %vm370 = vcmask 1031168
        %v371 = vsel %vm370, %v361, %v363
        %v372 = vsel %vm370, %v363, %v365
        %v373 = vsel %vm370, %v365, %v367
        %v374 = vsel %vm370, %v367, %v369
        %379 = vst [vmem:[#allocation3 + $0x20] sm:$0xf] %v371
        %380 = vst [vmem:[#allocation3 + $0x28] sm:$0xf] %v372
        %381 = vst [vmem:[#allocation3 + $0x30] sm:$0xf] %v373
        %382 = vst [vmem:[#allocation3 + $0x38] sm:$0xf] %v374
        %v383 = vld [vmem:[#allocation2] sm:$0xff]
        %v384 = vld [vmem:[#allocation2 + $0x8] sm:$0xff]
        %v385 = vld [vmem:[#allocation2 + $0x10] sm:$0xf]
        %v389 = vcombine.low %v383, %v383
        %v390 = vcombine.low %v384, %v384
        %v391 = vcombine.low %v385, %v385
        %392 = vrot.lane.b32.xlu0 %v389, 118
        %v393 = vpop.permute.xlu0 %392
        %394 = vrot.lane.b32.xlu0 %v383, 118
        %v395 = vpop.permute.xlu0 %394
        %396 = vrot.lane.b32.xlu0 %v390, 118
        %v397 = vpop.permute.xlu0 %396
        %398 = vrot.lane.b32.xlu0 %v384, 118
        %v399 = vpop.permute.xlu0 %398
        %400 = vrot.lane.b32.xlu0 %v391, 118
        %v401 = vpop.permute.xlu0 %400
        %vm402 = vcmask 965632
        %v403 = vsel %vm402, %v393, %v395
        %v404 = vsel %vm402, %v395, %v397
        %v405 = vsel %vm402, %v397, %v399
        %v406 = vsel %vm402, %v399, %v401
        %411 = vst [vmem:[#allocation3 + $0x20] sm:$0xf0] %v403
        %412 = vst [vmem:[#allocation3 + $0x28] sm:$0xf0] %v404
        %413 = vst [vmem:[#allocation3 + $0x30] sm:$0xf0] %v405
        %414 = vst [vmem:[#allocation3 + $0x38] sm:$0xf0] %v406
        %v415 = vld [vmem:[#allocation2] sm:$0xff]
        %v416 = vld [vmem:[#allocation2 + $0x8] sm:$0xff]
        %v417 = vld [vmem:[#allocation2 + $0x10] sm:$0xf]
        %v421 = vcombine.high %v415, %v415
        %v422 = vcombine.high %v416, %v416
        %423 = vrot.lane.b32.xlu0 %v415, 117
        %v424 = vpop.permute.xlu0 %423
        %425 = vrot.lane.b32.xlu0 %v421, 117
        %v426 = vpop.permute.xlu0 %425
        %427 = vrot.lane.b32.xlu0 %v416, 117
        %v428 = vpop.permute.xlu0 %427
        %429 = vrot.lane.b32.xlu0 %v422, 117
        %v430 = vpop.permute.xlu0 %429
        %431 = vrot.lane.b32.xlu0 %v417, 117
        %v432 = vpop.permute.xlu0 %431
        %vm433 = vcmask 957440
        %v434 = vsel %vm433, %v424, %v426
        %v435 = vsel %vm433, %v426, %v428
        %v436 = vsel %vm433, %v428, %v430
        %v437 = vsel %vm433, %v430, %v432
        %442 = vst [vmem:[#allocation3 + $0x40] sm:$0xf] %v434
        %443 = vst [vmem:[#allocation3 + $0x48] sm:$0xf] %v435
        %444 = vst [vmem:[#allocation3 + $0x50] sm:$0xf] %v436
        %445 = vst [vmem:[#allocation3 + $0x58] sm:$0xf] %v437
        %v446 = vld [vmem:[#allocation2] sm:$0xff]
        %v447 = vld [vmem:[#allocation2 + $0x8] sm:$0xff]
        %v448 = vld [vmem:[#allocation2 + $0x10] sm:$0xf]
        %v452 = vcombine.low %v446, %v446
        %v453 = vcombine.low %v447, %v447
        %v454 = vcombine.low %v448, %v448
        %455 = vrot.lane.b32.xlu0 %v452, 116
        %v456 = vpop.permute.xlu0 %455
        %457 = vrot.lane.b32.xlu0 %v446, 116
        %v458 = vpop.permute.xlu0 %457
        %459 = vrot.lane.b32.xlu0 %v453, 116
        %v460 = vpop.permute.xlu0 %459
        %461 = vrot.lane.b32.xlu0 %v447, 116
        %v462 = vpop.permute.xlu0 %461
        %463 = vrot.lane.b32.xlu0 %v454, 116
        %v464 = vpop.permute.xlu0 %463
        %vm465 = vcmask 949248
        %v466 = vsel %vm465, %v456, %v458
        %v467 = vsel %vm465, %v458, %v460
        %v468 = vsel %vm465, %v460, %v462
        %v469 = vsel %vm465, %v462, %v464
        %474 = vst [vmem:[#allocation3 + $0x40] sm:$0xf0] %v466
        %475 = vst [vmem:[#allocation3 + $0x48] sm:$0xf0] %v467
        %476 = vst [vmem:[#allocation3 + $0x50] sm:$0xf0] %v468
        %477 = vst [vmem:[#allocation3 + $0x58] sm:$0xf0] %v469
        %v478 = vld [vmem:[#allocation2] sm:$0xff]
        %v479 = vld [vmem:[#allocation2 + $0x8] sm:$0xff]
        %v480 = vld [vmem:[#allocation2 + $0x10] sm:$0xf]
        %v484 = vcombine.high %v478, %v478
        %v485 = vcombine.high %v479, %v479
        %486 = vrot.lane.b32.xlu0 %v478, 108
        %v487 = vpop.permute.xlu0 %486
        %488 = vrot.lane.b32.xlu0 %v484, 108
        %v489 = vpop.permute.xlu0 %488
        %490 = vrot.lane.b32.xlu0 %v479, 108
        %v491 = vpop.permute.xlu0 %490
        %492 = vrot.lane.b32.xlu0 %v485, 108
        %v493 = vpop.permute.xlu0 %492
        %494 = vrot.lane.b32.xlu0 %v480, 108
        %v495 = vpop.permute.xlu0 %494
        %vm496 = vcmask 883712
        %v497 = vsel %vm496, %v487, %v489
        %v498 = vsel %vm496, %v489, %v491
        %v499 = vsel %vm496, %v491, %v493
        %v500 = vsel %vm496, %v493, %v495
        %505 = vst [vmem:[#allocation3 + $0x60] sm:$0xf] %v497
        %506 = vst [vmem:[#allocation3 + $0x68] sm:$0xf] %v498
        %507 = vst [vmem:[#allocation3 + $0x70] sm:$0xf] %v499
        %508 = vst [vmem:[#allocation3 + $0x78] sm:$0xf] %v500
        %v509 = vld [vmem:[#allocation2] sm:$0xff]
        %v510 = vld [vmem:[#allocation2 + $0x8] sm:$0xff]
        %v511 = vld [vmem:[#allocation2 + $0x10] sm:$0xf]
        %v515 = vcombine.low %v509, %v509
        %v516 = vcombine.low %v510, %v510
        %v517 = vcombine.low %v511, %v511
        %518 = vrot.lane.b32.xlu0 %v515, 107
        %v519 = vpop.permute.xlu0 %518
        %520 = vrot.lane.b32.xlu0 %v509, 107
        %v521 = vpop.permute.xlu0 %520
        %522 = vrot.lane.b32.xlu0 %v516, 107
        %v523 = vpop.permute.xlu0 %522
        %524 = vrot.lane.b32.xlu0 %v510, 107
        %v525 = vpop.permute.xlu0 %524
        %526 = vrot.lane.b32.xlu0 %v517, 107
        %v527 = vpop.permute.xlu0 %526
        %vm528 = vcmask 875520
        %v529 = vsel %vm528, %v519, %v521
        %v530 = vsel %vm528, %v521, %v523
        %v531 = vsel %vm528, %v523, %v525
        %v532 = vsel %vm528, %v525, %v527
        %537 = vst [vmem:[#allocation3 + $0x60] sm:$0xf0] %v529
        %538 = vst [vmem:[#allocation3 + $0x68] sm:$0xf0] %v530
        %539 = vst [vmem:[#allocation3 + $0x70] sm:$0xf0] %v531
        %540 = vst [vmem:[#allocation3 + $0x78] sm:$0xf0] %v532
        %v541 = vld [vmem:[#allocation2] sm:$0xff]
        %v542 = vld [vmem:[#allocation2 + $0x8] sm:$0xff]
        %v543 = vld [vmem:[#allocation2 + $0x10] sm:$0xf]
        %v547 = vcombine.high %v541, %v541
        %v548 = vcombine.high %v542, %v542
        %549 = vrot.lane.b32.xlu0 %v541, 106
        %v550 = vpop.permute.xlu0 %549
        %551 = vrot.lane.b32.xlu0 %v547, 106
        %v552 = vpop.permute.xlu0 %551
        %553 = vrot.lane.b32.xlu0 %v542, 106
        %v554 = vpop.permute.xlu0 %553
        %555 = vrot.lane.b32.xlu0 %v548, 106
        %v556 = vpop.permute.xlu0 %555
        %557 = vrot.lane.b32.xlu0 %v543, 106
        %v558 = vpop.permute.xlu0 %557
        %vm559 = vcmask 867328
        %v560 = vsel %vm559, %v550, %v552
        %v561 = vsel %vm559, %v552, %v554
        %v562 = vsel %vm559, %v554, %v556
        %v563 = vsel %vm559, %v556, %v558
        %568 = vst [vmem:[#allocation3 + $0x80] sm:$0xf] %v560
        %569 = vst [vmem:[#allocation3 + $0x88] sm:$0xf] %v561
        %570 = vst [vmem:[#allocation3 + $0x90] sm:$0xf] %v562
        %571 = vst [vmem:[#allocation3 + $0x98] sm:$0xf] %v563
        %v572 = vld [vmem:[#allocation2] sm:$0xff]
        %v573 = vld [vmem:[#allocation2 + $0x8] sm:$0xff]
        %v574 = vld [vmem:[#allocation2 + $0x10] sm:$0xf]
        %v578 = vcombine.low %v572, %v572
        %v579 = vcombine.low %v573, %v573
        %v580 = vcombine.low %v574, %v574
        %581 = vrot.lane.b32.xlu0 %v578, 28
        %v582 = vpop.permute.xlu0 %581
        %583 = vrot.lane.b32.xlu0 %v572, 28
        %v584 = vpop.permute.xlu0 %583
        %585 = vrot.lane.b32.xlu0 %v579, 28
        %v586 = vpop.permute.xlu0 %585
        %587 = vrot.lane.b32.xlu0 %v573, 28
        %v588 = vpop.permute.xlu0 %587
        %589 = vrot.lane.b32.xlu0 %v580, 28
        %v590 = vpop.permute.xlu0 %589
        %vm591 = vcmask 228352
        %v592 = vsel %vm591, %v582, %v584
        %v593 = vsel %vm591, %v584, %v586
        %v594 = vsel %vm591, %v586, %v588
        %v595 = vsel %vm591, %v588, %v590
        %600 = vst [vmem:[#allocation3 + $0x80] sm:$0xf0] %v592
        %601 = vst [vmem:[#allocation3 + $0x88] sm:$0xf0] %v593
        %602 = vst [vmem:[#allocation3 + $0x90] sm:$0xf0] %v594
        %603 = vst [vmem:[#allocation3 + $0x98] sm:$0xf0] %v595
        %v604 = vld [vmem:[#allocation2] sm:$0xff]
        %v605 = vld [vmem:[#allocation2 + $0x8] sm:$0xff]
        %v606 = vld [vmem:[#allocation2 + $0x10] sm:$0xf]
        %v610 = vcombine.high %v604, %v604
        %v611 = vcombine.high %v605, %v605
        %612 = vrot.lane.b32.xlu0 %v604, 27
        %v613 = vpop.permute.xlu0 %612
        %614 = vrot.lane.b32.xlu0 %v610, 27
        %v615 = vpop.permute.xlu0 %614
        %616 = vrot.lane.b32.xlu0 %v605, 27
        %v617 = vpop.permute.xlu0 %616
        %618 = vrot.lane.b32.xlu0 %v611, 27
        %v619 = vpop.permute.xlu0 %618
        %620 = vrot.lane.b32.xlu0 %v606, 27
        %v621 = vpop.permute.xlu0 %620
        %vm622 = vcmask 220160
        %v623 = vsel %vm622, %v613, %v615
        %v624 = vsel %vm622, %v615, %v617
        %v625 = vsel %vm622, %v617, %v619
        %v626 = vsel %vm622, %v619, %v621
        %631 = vst [vmem:[#allocation3 + $0xa0] sm:$0xf] %v623
        %632 = vst [vmem:[#allocation3 + $0xa8] sm:$0xf] %v624
        %633 = vst [vmem:[#allocation3 + $0xb0] sm:$0xf] %v625
        %634 = vst [vmem:[#allocation3 + $0xb8] sm:$0xf] %v626
        %v635 = vld [vmem:[#allocation2] sm:$0xff]
        %v636 = vld [vmem:[#allocation2 + $0x8] sm:$0xff]
        %v637 = vld [vmem:[#allocation2 + $0x10] sm:$0xf]
        %v641 = vcombine.low %v635, %v635
        %v642 = vcombine.low %v636, %v636
        %v643 = vcombine.low %v637, %v637
        %644 = vrot.lane.b32.xlu0 %v641, 26
        %v645 = vpop.permute.xlu0 %644
        %646 = vrot.lane.b32.xlu0 %v635, 26
        %v647 = vpop.permute.xlu0 %646
        %648 = vrot.lane.b32.xlu0 %v642, 26
        %v649 = vpop.permute.xlu0 %648
        %650 = vrot.lane.b32.xlu0 %v636, 26
        %v651 = vpop.permute.xlu0 %650
        %652 = vrot.lane.b32.xlu0 %v643, 26
        %v653 = vpop.permute.xlu0 %652
        %vm654 = vcmask 211968
        %v655 = vsel %vm654, %v645, %v647
        %v656 = vsel %vm654, %v647, %v649
        %v657 = vsel %vm654, %v649, %v651
        %v658 = vsel %vm654, %v651, %v653
        %663 = vst [vmem:[#allocation3 + $0xa0] sm:$0xf0] %v655
        %664 = vst [vmem:[#allocation3 + $0xa8] sm:$0xf0] %v656
        %665 = vst [vmem:[#allocation3 + $0xb0] sm:$0xf0] %v657
        %666 = vst [vmem:[#allocation3 + $0xb8] sm:$0xf0] %v658
        %v667 = vld [vmem:[#allocation2] sm:$0xff]
        %v668 = vld [vmem:[#allocation2 + $0x8] sm:$0xff]
        %v669 = vld [vmem:[#allocation2 + $0x10] sm:$0xf]
        %v673 = vcombine.high %v667, %v667
        %v674 = vcombine.high %v668, %v668
        %675 = vrot.lane.b32.xlu0 %v667, 18
        %v676 = vpop.permute.xlu0 %675
        %677 = vrot.lane.b32.xlu0 %v673, 18
        %v678 = vpop.permute.xlu0 %677
        %679 = vrot.lane.b32.xlu0 %v668, 18
        %v680 = vpop.permute.xlu0 %679
        %681 = vrot.lane.b32.xlu0 %v674, 18
        %v682 = vpop.permute.xlu0 %681
        %683 = vrot.lane.b32.xlu0 %v669, 18
        %v684 = vpop.permute.xlu0 %683
        %vm685 = vcmask 146432
        %v686 = vsel %vm685, %v676, %v678
        %v687 = vsel %vm685, %v678, %v680
        %v688 = vsel %vm685, %v680, %v682
        %v689 = vsel %vm685, %v682, %v684
        %694 = vst [vmem:[#allocation3 + $0xc0] sm:$0xf] %v686
        %695 = vst [vmem:[#allocation3 + $0xc8] sm:$0xf] %v687
        %696 = vst [vmem:[#allocation3 + $0xd0] sm:$0xf] %v688
        %697 = vst [vmem:[#allocation3 + $0xd8] sm:$0xf] %v689
        %v698 = vld [vmem:[#allocation2] sm:$0xff]
        %v699 = vld [vmem:[#allocation2 + $0x8] sm:$0xff]
        %v700 = vld [vmem:[#allocation2 + $0x10] sm:$0xf]
        %v704 = vcombine.low %v698, %v698
        %v705 = vcombine.low %v699, %v699
        %v706 = vcombine.low %v700, %v700
        %707 = vrot.lane.b32.xlu0 %v704, 17
        %v708 = vpop.permute.xlu0 %707
        %709 = vrot.lane.b32.xlu0 %v698, 17
        %v710 = vpop.permute.xlu0 %709
        %711 = vrot.lane.b32.xlu0 %v705, 17
        %v712 = vpop.permute.xlu0 %711
        %713 = vrot.lane.b32.xlu0 %v699, 17
        %v714 = vpop.permute.xlu0 %713
        %715 = vrot.lane.b32.xlu0 %v706, 17
        %v716 = vpop.permute.xlu0 %715
        %vm717 = vcmask 138240
        %v718 = vsel %vm717, %v708, %v710
        %v719 = vsel %vm717, %v710, %v712
        %v720 = vsel %vm717, %v712, %v714
        %v721 = vsel %vm717, %v714, %v716
        %726 = vst [vmem:[#allocation3 + $0xc0] sm:$0xf0] %v718
        %727 = vst [vmem:[#allocation3 + $0xc8] sm:$0xf0] %v719
        %728 = vst [vmem:[#allocation3 + $0xd0] sm:$0xf0] %v720
        %729 = vst [vmem:[#allocation3 + $0xd8] sm:$0xf0] %v721
        %v730 = vld [vmem:[#allocation2] sm:$0xff]
        %v731 = vld [vmem:[#allocation2 + $0x8] sm:$0xff]
        %v732 = vld [vmem:[#allocation2 + $0x10] sm:$0xf]
        %v736 = vcombine.high %v730, %v730
        %v737 = vcombine.high %v731, %v731
        %738 = vrot.lane.b32.xlu0 %v730, 16
        %v739 = vpop.permute.xlu0 %738
        %740 = vrot.lane.b32.xlu0 %v736, 16
        %v741 = vpop.permute.xlu0 %740
        %742 = vrot.lane.b32.xlu0 %v731, 16
        %v743 = vpop.permute.xlu0 %742
        %744 = vrot.lane.b32.xlu0 %v737, 16
        %v745 = vpop.permute.xlu0 %744
        %746 = vrot.lane.b32.xlu0 %v732, 16
        %v747 = vpop.permute.xlu0 %746
        %vm748 = vcmask 130048
        %v749 = vsel %vm748, %v739, %v741
        %v750 = vsel %vm748, %v741, %v743
        %v751 = vsel %vm748, %v743, %v745
        %v752 = vsel %vm748, %v745, %v747
        %757 = vst [vmem:[#allocation3 + $0xe0] sm:$0xf] %v749
        %758 = vst [vmem:[#allocation3 + $0xe8] sm:$0xf] %v750
        %759 = vst [vmem:[#allocation3 + $0xf0] sm:$0xf] %v751
        %760 = vst [vmem:[#allocation3 + $0xf8] sm:$0xf] %v752
        %v761 = vld [vmem:[#allocation2] sm:$0xff]
        %v762 = vld [vmem:[#allocation2 + $0x8] sm:$0xff]
        %v763 = vld [vmem:[#allocation2 + $0x10] sm:$0xf]
        %v767 = vcombine.low %v761, %v761
        %v768 = vcombine.low %v762, %v762
        %v769 = vcombine.low %v763, %v763
        %770 = vrot.lane.b32.xlu0 %v767, 8
        %v771 = vpop.permute.xlu0 %770
        %772 = vrot.lane.b32.xlu0 %v761, 8
        %v773 = vpop.permute.xlu0 %772
        %774 = vrot.lane.b32.xlu0 %v768, 8
        %v775 = vpop.permute.xlu0 %774
        %776 = vrot.lane.b32.xlu0 %v762, 8
        %v777 = vpop.permute.xlu0 %776
        %778 = vrot.lane.b32.xlu0 %v769, 8
        %v779 = vpop.permute.xlu0 %778
        %vm780 = vcmask 64512
        %v781 = vsel %vm780, %v771, %v773
        %v782 = vsel %vm780, %v773, %v775
        %v783 = vsel %vm780, %v775, %v777
        %v784 = vsel %vm780, %v777, %v779
        %789 = vst [vmem:[#allocation3 + $0xe0] sm:$0xf0] %v781
        %790 = vst [vmem:[#allocation3 + $0xe8] sm:$0xf0] %v782
        %791 = vst [vmem:[#allocation3 + $0xf0] sm:$0xf0] %v783
        %792 = vst [vmem:[#allocation3 + $0xf8] sm:$0xf0] %v784
        %v793 = vld [vmem:[#allocation2] sm:$0xff]
        %v794 = vld [vmem:[#allocation2 + $0x8] sm:$0xff]
        %v795 = vld [vmem:[#allocation2 + $0x10] sm:$0xf]
        %v799 = vcombine.high %v793, %v793
        %v800 = vcombine.high %v794, %v794
        %801 = vrot.lane.b32.xlu0 %v793, 7
        %v802 = vpop.permute.xlu0 %801
        %803 = vrot.lane.b32.xlu0 %v799, 7
        %v804 = vpop.permute.xlu0 %803
        %805 = vrot.lane.b32.xlu0 %v794, 7
        %v806 = vpop.permute.xlu0 %805
        %807 = vrot.lane.b32.xlu0 %v800, 7
        %v808 = vpop.permute.xlu0 %807
        %809 = vrot.lane.b32.xlu0 %v795, 7
        %v810 = vpop.permute.xlu0 %809
        %vm811 = vcmask 56320
        %v812 = vsel %vm811, %v802, %v804
        %v813 = vsel %vm811, %v804, %v806
        %v814 = vsel %vm811, %v806, %v808
        %v815 = vsel %vm811, %v808, %v810
        %820 = vst [vmem:[#allocation3 + $0x100] sm:$0xf] %v812
        %821 = vst [vmem:[#allocation3 + $0x108] sm:$0xf] %v813
        %822 = vst [vmem:[#allocation3 + $0x110] sm:$0xf] %v814
        %823 = vst [vmem:[#allocation3 + $0x118] sm:$0xf] %v815
        %v824 = vld [vmem:[#allocation2] sm:$0xff]
        %v825 = vld [vmem:[#allocation2 + $0x8] sm:$0xff]
        %v826 = vld [vmem:[#allocation2 + $0x10] sm:$0xf]
        %v830 = vcombine.low %v824, %v824
        %v831 = vcombine.low %v825, %v825
        %v832 = vcombine.low %v826, %v826
        %833 = vrot.lane.b32.xlu0 %v830, 6
        %v834 = vpop.permute.xlu0 %833
        %835 = vrot.lane.b32.xlu0 %v824, 6
        %v836 = vpop.permute.xlu0 %835
        %837 = vrot.lane.b32.xlu0 %v831, 6
        %v838 = vpop.permute.xlu0 %837
        %839 = vrot.lane.b32.xlu0 %v825, 6
        %v840 = vpop.permute.xlu0 %839
        %841 = vrot.lane.b32.xlu0 %v832, 6
        %v842 = vpop.permute.xlu0 %841
        %vm843 = vcmask 48128
        %v844 = vsel %vm843, %v834, %v836
        %v845 = vsel %vm843, %v836, %v838
        %v846 = vsel %vm843, %v838, %v840
        %v847 = vsel %vm843, %v840, %v842
        %852 = vst [vmem:[#allocation3 + $0x100] sm:$0xf0] %v844
        %853 = vst [vmem:[#allocation3 + $0x108] sm:$0xf0] %v845
        %854 = vst [vmem:[#allocation3 + $0x110] sm:$0xf0] %v846
        %855 = vst [vmem:[#allocation3 + $0x118] sm:$0xf0] %v847
        %v856 = vld [vmem:[#allocation2 + $0x4] sm:$0xff]
        %v857 = vld [vmem:[#allocation2 + $0xc] sm:$0xff]
        %v858 = vld [vmem:[#allocation2 + $0x14] sm:$0xf]
        %v862 = vcombine.high %v856, %v856
        %v863 = vcombine.high %v857, %v857
        %864 = vrot.lane.b32.xlu0 %v856, 56
        %v865 = vpop.permute.xlu0 %864
        %866 = vrot.lane.b32.xlu0 %v862, 56
        %v867 = vpop.permute.xlu0 %866
        %868 = vrot.lane.b32.xlu0 %v857, 56
        %v869 = vpop.permute.xlu0 %868
        %870 = vrot.lane.b32.xlu0 %v863, 56
        %v871 = vpop.permute.xlu0 %870
        %872 = vrot.lane.b32.xlu0 %v858, 56
        %v873 = vpop.permute.xlu0 %872
        %vm874 = vcmask 457728
        %v875 = vsel %vm874, %v865, %v867
        %v876 = vsel %vm874, %v867, %v869
        %v877 = vsel %vm874, %v869, %v871
        %v878 = vsel %vm874, %v871, %v873
        %883 = vst [vmem:[#allocation3 + $0x120] sm:$0xf] %v875
        %884 = vst [vmem:[#allocation3 + $0x128] sm:$0xf] %v876
        %885 = vst [vmem:[#allocation3 + $0x130] sm:$0xf] %v877
        %886 = vst [vmem:[#allocation3 + $0x138] sm:$0xf] %v878
        %v887 = vld [vmem:[#allocation2 + $0x4] sm:$0xff]
        %v888 = vld [vmem:[#allocation2 + $0xc] sm:$0xff]
        %v889 = vld [vmem:[#allocation2 + $0x14] sm:$0xf]
        %v893 = vcombine.low %v887, %v887
        %v894 = vcombine.low %v888, %v888
        %v895 = vcombine.low %v889, %v889
        %896 = vrot.lane.b32.xlu0 %v893, 55
        %v897 = vpop.permute.xlu0 %896
        %898 = vrot.lane.b32.xlu0 %v887, 55
        %v899 = vpop.permute.xlu0 %898
        %900 = vrot.lane.b32.xlu0 %v894, 55
        %v901 = vpop.permute.xlu0 %900
        %902 = vrot.lane.b32.xlu0 %v888, 55
        %v903 = vpop.permute.xlu0 %902
        %904 = vrot.lane.b32.xlu0 %v895, 55
        %v905 = vpop.permute.xlu0 %904
        %vm906 = vcmask 449536
        %v907 = vsel %vm906, %v897, %v899
        %v908 = vsel %vm906, %v899, %v901
        %v909 = vsel %vm906, %v901, %v903
        %v910 = vsel %vm906, %v903, %v905
        %915 = vst [vmem:[#allocation3 + $0x120] sm:$0xf0] %v907
        %916 = vst [vmem:[#allocation3 + $0x128] sm:$0xf0] %v908
        %917 = vst [vmem:[#allocation3 + $0x130] sm:$0xf0] %v909
        %918 = vst [vmem:[#allocation3 + $0x138] sm:$0xf0] %v910
        %v919 = vld [vmem:[#allocation2 + $0x4] sm:$0xff]
        %v920 = vld [vmem:[#allocation2 + $0xc] sm:$0xff]
        %v921 = vld [vmem:[#allocation2 + $0x14] sm:$0xf]
        %v925 = vcombine.high %v919, %v919
        %v926 = vcombine.high %v920, %v920
        %927 = vrot.lane.b32.xlu0 %v919, 54
        %v928 = vpop.permute.xlu0 %927
        %929 = vrot.lane.b32.xlu0 %v925, 54
        %v930 = vpop.permute.xlu0 %929
        %931 = vrot.lane.b32.xlu0 %v920, 54
        %v932 = vpop.permute.xlu0 %931
        %933 = vrot.lane.b32.xlu0 %v926, 54
        %v934 = vpop.permute.xlu0 %933
        %935 = vrot.lane.b32.xlu0 %v921, 54
        %v936 = vpop.permute.xlu0 %935
        %vm937 = vcmask 441344
        %v938 = vsel %vm937, %v928, %v930
        %v939 = vsel %vm937, %v930, %v932
        %v940 = vsel %vm937, %v932, %v934
        %v941 = vsel %vm937, %v934, %v936
        %946 = vst [vmem:[#allocation3 + $0x140] sm:$0xf] %v938
        %947 = vst [vmem:[#allocation3 + $0x148] sm:$0xf] %v939
        %948 = vst [vmem:[#allocation3 + $0x150] sm:$0xf] %v940
        %949 = vst [vmem:[#allocation3 + $0x158] sm:$0xf] %v941
        %v950 = vld [vmem:[#allocation2 + $0x4] sm:$0xff]
        %v951 = vld [vmem:[#allocation2 + $0xc] sm:$0xff]
        %v952 = vld [vmem:[#allocation2 + $0x14] sm:$0xf]
        %v956 = vcombine.low %v950, %v950
        %v957 = vcombine.low %v951, %v951
        %v958 = vcombine.low %v952, %v952
        %959 = vrot.lane.b32.xlu0 %v956, 46
        %v960 = vpop.permute.xlu0 %959
        %961 = vrot.lane.b32.xlu0 %v950, 46
        %v962 = vpop.permute.xlu0 %961
        %963 = vrot.lane.b32.xlu0 %v957, 46
        %v964 = vpop.permute.xlu0 %963
        %965 = vrot.lane.b32.xlu0 %v951, 46
        %v966 = vpop.permute.xlu0 %965
        %967 = vrot.lane.b32.xlu0 %v958, 46
        %v968 = vpop.permute.xlu0 %967
        %vm969 = vcmask 375808
        %v970 = vsel %vm969, %v960, %v962
        %v971 = vsel %vm969, %v962, %v964
        %v972 = vsel %vm969, %v964, %v966
        %v973 = vsel %vm969, %v966, %v968
        %978 = vst [vmem:[#allocation3 + $0x140] sm:$0xf0] %v970
        %979 = vst [vmem:[#allocation3 + $0x148] sm:$0xf0] %v971
        %980 = vst [vmem:[#allocation3 + $0x150] sm:$0xf0] %v972
        %981 = vst [vmem:[#allocation3 + $0x158] sm:$0xf0] %v973
        %v982 = vld [vmem:[#allocation2 + $0x4] sm:$0xff]
        %v983 = vld [vmem:[#allocation2 + $0xc] sm:$0xff]
        %v984 = vld [vmem:[#allocation2 + $0x14] sm:$0xf]
        %v988 = vcombine.high %v982, %v982
        %v989 = vcombine.high %v983, %v983
        %990 = vrot.lane.b32.xlu0 %v982, 45
        %v991 = vpop.permute.xlu0 %990
        %992 = vrot.lane.b32.xlu0 %v988, 45
        %v993 = vpop.permute.xlu0 %992
        %994 = vrot.lane.b32.xlu0 %v983, 45
        %v995 = vpop.permute.xlu0 %994
        %996 = vrot.lane.b32.xlu0 %v989, 45
        %v997 = vpop.permute.xlu0 %996
        %998 = vrot.lane.b32.xlu0 %v984, 45
        %v999 = vpop.permute.xlu0 %998
        %vm1000 = vcmask 367616
        %v1001 = vsel %vm1000, %v991, %v993
        %v1002 = vsel %vm1000, %v993, %v995
        %v1003 = vsel %vm1000, %v995, %v997
        %v1004 = vsel %vm1000, %v997, %v999
        %1009 = vst [vmem:[#allocation3 + $0x160] sm:$0xf] %v1001
        %1010 = vst [vmem:[#allocation3 + $0x168] sm:$0xf] %v1002
        %1011 = vst [vmem:[#allocation3 + $0x170] sm:$0xf] %v1003
        %1012 = vst [vmem:[#allocation3 + $0x178] sm:$0xf] %v1004
        %v1013 = vld [vmem:[#allocation2 + $0x4] sm:$0xff]
        %v1014 = vld [vmem:[#allocation2 + $0xc] sm:$0xff]
        %v1015 = vld [vmem:[#allocation2 + $0x14] sm:$0xf]
        %v1019 = vcombine.low %v1013, %v1013
        %v1020 = vcombine.low %v1014, %v1014
        %v1021 = vcombine.low %v1015, %v1015
        %1022 = vrot.lane.b32.xlu0 %v1019, 44
        %v1023 = vpop.permute.xlu0 %1022
        %1024 = vrot.lane.b32.xlu0 %v1013, 44
        %v1025 = vpop.permute.xlu0 %1024
        %1026 = vrot.lane.b32.xlu0 %v1020, 44
        %v1027 = vpop.permute.xlu0 %1026
        %1028 = vrot.lane.b32.xlu0 %v1014, 44
        %v1029 = vpop.permute.xlu0 %1028
        %1030 = vrot.lane.b32.xlu0 %v1021, 44
        %v1031 = vpop.permute.xlu0 %1030
        %vm1032 = vcmask 359424
        %v1033 = vsel %vm1032, %v1023, %v1025
        %v1034 = vsel %vm1032, %v1025, %v1027
        %v1035 = vsel %vm1032, %v1027, %v1029
        %v1036 = vsel %vm1032, %v1029, %v1031
        %1041 = vst [vmem:[#allocation3 + $0x160] sm:$0xf0] %v1033
        %1042 = vst [vmem:[#allocation3 + $0x168] sm:$0xf0] %v1034
        %1043 = vst [vmem:[#allocation3 + $0x170] sm:$0xf0] %v1035
        %1044 = vst [vmem:[#allocation3 + $0x178] sm:$0xf0] %v1036
        %v1045 = vld [vmem:[#allocation2 + $0x4] sm:$0xff]
        %v1046 = vld [vmem:[#allocation2 + $0xc] sm:$0xff]
        %v1047 = vld [vmem:[#allocation2 + $0x14] sm:$0xf]
        %v1051 = vcombine.high %v1045, %v1045
        %v1052 = vcombine.high %v1046, %v1046
        %1053 = vrot.lane.b32.xlu0 %v1045, 36
        %v1054 = vpop.permute.xlu0 %1053
        %1055 = vrot.lane.b32.xlu0 %v1051, 36
        %v1056 = vpop.permute.xlu0 %1055
        %1057 = vrot.lane.b32.xlu0 %v1046, 36
        %v1058 = vpop.permute.xlu0 %1057
        %1059 = vrot.lane.b32.xlu0 %v1052, 36
        %v1060 = vpop.permute.xlu0 %1059
        %1061 = vrot.lane.b32.xlu0 %v1047, 36
        %v1062 = vpop.permute.xlu0 %1061
        %vm1063 = vcmask 293888
        %v1064 = vsel %vm1063, %v1054, %v1056
        %v1065 = vsel %vm1063, %v1056, %v1058
        %v1066 = vsel %vm1063, %v1058, %v1060
        %v1067 = vsel %vm1063, %v1060, %v1062
        %1072 = vst [vmem:[#allocation3 + $0x180] sm:$0xf] %v1064
        %1073 = vst [vmem:[#allocation3 + $0x188] sm:$0xf] %v1065
        %1074 = vst [vmem:[#allocation3 + $0x190] sm:$0xf] %v1066
        %1075 = vst [vmem:[#allocation3 + $0x198] sm:$0xf] %v1067
        %v1076 = vld [vmem:[#allocation2 + $0x4] sm:$0xff]
        %v1077 = vld [vmem:[#allocation2 + $0xc] sm:$0xff]
        %v1078 = vld [vmem:[#allocation2 + $0x14] sm:$0xf]
        %v1082 = vcombine.low %v1076, %v1076
        %v1083 = vcombine.low %v1077, %v1077
        %v1084 = vcombine.low %v1078, %v1078
        %1085 = vrot.lane.b32.xlu0 %v1082, 35
        %v1086 = vpop.permute.xlu0 %1085
        %1087 = vrot.lane.b32.xlu0 %v1076, 35
        %v1088 = vpop.permute.xlu0 %1087
        %1089 = vrot.lane.b32.xlu0 %v1083, 35
        %v1090 = vpop.permute.xlu0 %1089
        %1091 = vrot.lane.b32.xlu0 %v1077, 35
        %v1092 = vpop.permute.xlu0 %1091
        %1093 = vrot.lane.b32.xlu0 %v1084, 35
        %v1094 = vpop.permute.xlu0 %1093
        %vm1095 = vcmask 285696
        %v1096 = vsel %vm1095, %v1086, %v1088
        %v1097 = vsel %vm1095, %v1088, %v1090
        %v1098 = vsel %vm1095, %v1090, %v1092
        %v1099 = vsel %vm1095, %v1092, %v1094
        %1104 = vst [vmem:[#allocation3 + $0x180] sm:$0xf0] %v1096
        %1105 = vst [vmem:[#allocation3 + $0x188] sm:$0xf0] %v1097
        %1106 = vst [vmem:[#allocation3 + $0x190] sm:$0xf0] %v1098
        %1107 = vst [vmem:[#allocation3 + $0x198] sm:$0xf0] %v1099
        %v1108 = vld [vmem:[#allocation2 + $0x4] sm:$0xff]
        %v1109 = vld [vmem:[#allocation2 + $0xc] sm:$0xff]
        %v1110 = vld [vmem:[#allocation2 + $0x14] sm:$0xf]
        %v1114 = vcombine.high %v1108, %v1108
        %v1115 = vcombine.high %v1109, %v1109
        %1116 = vrot.lane.b32.xlu0 %v1108, 34
        %v1117 = vpop.permute.xlu0 %1116
        %1118 = vrot.lane.b32.xlu0 %v1114, 34
        %v1119 = vpop.permute.xlu0 %1118
        %1120 = vrot.lane.b32.xlu0 %v1109, 34
        %v1121 = vpop.permute.xlu0 %1120
        %1122 = vrot.lane.b32.xlu0 %v1115, 34
        %v1123 = vpop.permute.xlu0 %1122
        %1124 = vrot.lane.b32.xlu0 %v1110, 34
        %v1125 = vpop.permute.xlu0 %1124
        %vm1126 = vcmask 277504
        %v1127 = vsel %vm1126, %v1117, %v1119
        %v1128 = vsel %vm1126, %v1119, %v1121
        %v1129 = vsel %vm1126, %v1121, %v1123
        %v1130 = vsel %vm1126, %v1123, %v1125
        %1135 = vst [vmem:[#allocation3 + $0x1a0] sm:$0xf] %v1127
        %1136 = vst [vmem:[#allocation3 + $0x1a8] sm:$0xf] %v1128
        %1137 = vst [vmem:[#allocation3 + $0x1b0] sm:$0xf] %v1129
        %1138 = vst [vmem:[#allocation3 + $0x1b8] sm:$0xf] %v1130
        %v1139 = vld [vmem:[%s2] sm:$0xff]
        %v1140 = vld [vmem:[#allocation3] sm:$0xff]
        %v1141 = vld [vmem:[#allocation3 + $0x8] sm:$0xff]
        %v1142 = vld [vmem:[#allocation3 + $0x10] sm:$0xff]
        %v1143 = vld [vmem:[#allocation3 + $0x18] sm:$0xff]
        %v1144 = vld [vmem:[#allocation3 + $0x20] sm:$0xff]
        %v1145 = vld [vmem:[#allocation3 + $0x28] sm:$0xff]
        %v1146 = vld [vmem:[#allocation3 + $0x30] sm:$0xff]
        %v1147 = vld [vmem:[#allocation3 + $0x38] sm:$0xff]
        %v1148 = vld [vmem:[#allocation3 + $0x40] sm:$0xff]
        %v1149 = vld [vmem:[#allocation3 + $0x48] sm:$0xff]
        %v1150 = vld [vmem:[#allocation3 + $0x50] sm:$0xff]
        %v1151 = vld [vmem:[#allocation3 + $0x58] sm:$0xff]
        %v1152 = vld [vmem:[#allocation3 + $0x60] sm:$0xff]
        %v1153 = vld [vmem:[#allocation3 + $0x68] sm:$0xff]
        %v1154 = vld [vmem:[#allocation3 + $0x70] sm:$0xff]
        %v1155 = vld [vmem:[#allocation3 + $0x78] sm:$0xff]
        %v1156 = vld [vmem:[#allocation3 + $0x80] sm:$0xff]
        %v1157 = vld [vmem:[#allocation3 + $0x88] sm:$0xff]
        %v1158 = vld [vmem:[#allocation3 + $0x90] sm:$0xff]
        %v1159 = vld [vmem:[#allocation3 + $0x98] sm:$0xff]
        %v1160 = vld [vmem:[#allocation3 + $0xa0] sm:$0xff]
        %v1161 = vld [vmem:[#allocation3 + $0xa8] sm:$0xff]
        %v1162 = vld [vmem:[#allocation3 + $0xb0] sm:$0xff]
        %v1163 = vld [vmem:[#allocation3 + $0xb8] sm:$0xff]
        %v1164 = vld [vmem:[#allocation3 + $0xc0] sm:$0xff]
        %v1165 = vld [vmem:[#allocation3 + $0xc8] sm:$0xff]
        %v1166 = vld [vmem:[#allocation3 + $0xd0] sm:$0xff]
        %v1167 = vld [vmem:[#allocation3 + $0xd8] sm:$0xff]
        %v1168 = vld [vmem:[#allocation3 + $0xe0] sm:$0xff]
        %v1169 = vld [vmem:[#allocation3 + $0xe8] sm:$0xff]
        %v1170 = vld [vmem:[#allocation3 + $0xf0] sm:$0xff]
        %v1171 = vld [vmem:[#allocation3 + $0xf8] sm:$0xff]
        %v1172 = vld [vmem:[#allocation3 + $0x100] sm:$0xff]
        %v1173 = vld [vmem:[#allocation3 + $0x108] sm:$0xff]
        %v1174 = vld [vmem:[#allocation3 + $0x110] sm:$0xff]
        %v1175 = vld [vmem:[#allocation3 + $0x118] sm:$0xff]
        %v1176 = vld [vmem:[#allocation3 + $0x120] sm:$0xff]
        %v1177 = vld [vmem:[#allocation3 + $0x128] sm:$0xff]
        %v1178 = vld [vmem:[#allocation3 + $0x130] sm:$0xff]
        %v1179 = vld [vmem:[#allocation3 + $0x138] sm:$0xff]
        %v1180 = vld [vmem:[#allocation3 + $0x140] sm:$0xff]
        %v1181 = vld [vmem:[#allocation3 + $0x148] sm:$0xff]
        %v1182 = vld [vmem:[#allocation3 + $0x150] sm:$0xff]
        %v1183 = vld [vmem:[#allocation3 + $0x158] sm:$0xff]
        %v1184 = vld [vmem:[#allocation3 + $0x160] sm:$0xff]
        %v1185 = vld [vmem:[#allocation3 + $0x168] sm:$0xff]
        %v1186 = vld [vmem:[#allocation3 + $0x170] sm:$0xff]
        %v1187 = vld [vmem:[#allocation3 + $0x178] sm:$0xff]
        %v1188 = vld [vmem:[#allocation3 + $0x180] sm:$0xff]
        %v1189 = vld [vmem:[#allocation3 + $0x188] sm:$0xff]
        %v1190 = vld [vmem:[#allocation3 + $0x190] sm:$0xff]
        %v1191 = vld [vmem:[#allocation3 + $0x198] sm:$0xff]
        %v1192 = vld [vmem:[#allocation3 + $0x1a0] sm:$0xff]
        %v1193 = vld [vmem:[#allocation3 + $0x1a8] sm:$0xff]
        %v1194 = vld [vmem:[#allocation3 + $0x1b0] sm:$0xff]
        %v1195 = vld [vmem:[#allocation3 + $0x1b8] sm:$0xff]
        %v1196 = vld [vmem:[#allocation3 + $0x1c0] sm:$0xff]
        %v1197 = vld [vmem:[#allocation3 + $0x1c8] sm:$0xff]
        %v1198 = vld [vmem:[#allocation3 + $0x1d0] sm:$0xff]
        %v1199 = vld [vmem:[#allocation3 + $0x1d8] sm:$0xff]
        %v1200 = vld [vmem:[#allocation3 + $0x1e0] sm:$0xff]
        %v1201 = vld [vmem:[#allocation3 + $0x1e8] sm:$0xff]
        %v1202 = vld [vmem:[#allocation3 + $0x1f0] sm:$0xff]
        %v1203 = vld [vmem:[#allocation3 + $0x1f8] sm:$0xff]
        %v1204 = vld [vmem:[%s3] sm:$0xff]
        %1206 = vset.pattern.permute.xlu0 0
        %1207 = vperm.xlu0 %1206, %v1204
        %v1208 = vpop.permute.xlu0 %1207
        %1210 = vmatprep.subr.mxu0 %v1141
        %1211 = vmatpush1.msra.mxu0 %v1140
        %1212 = vmatprep.subr.mxu0 %v1145
        %1213 = vmatpush1.msra.mxu0 %v1144
        %1214 = vmatprep.subr.mxu0 %v1149
        %1215 = vmatpush1.msra.mxu0 %v1148
        %1216 = vmatprep.subr.mxu0 %v1153
        %1217 = vmatpush1.msra.mxu0 %v1152
        %1218 = vmatprep.subr.mxu0 %v1157
        %1219 = vmatpush1.msra.mxu0 %v1156
        %1220 = vmatprep.subr.mxu0 %v1161
        %1221 = vmatpush1.msra.mxu0 %v1160
        %1222 = vmatprep.subr.mxu0 %v1165
        %1223 = vmatpush1.msra.mxu0 %v1164
        %1224 = vmatprep.subr.mxu0 %v1169
        %1225 = vmatpush1.msra.mxu0 %v1168
        %1226 = vmatprep.subr.mxu0 %v1173
        %1227 = vmatpush1.msra.mxu0 %v1172
        %1228 = vmatprep.subr.mxu0 %v1177
        %1229 = vmatpush1.msra.mxu0 %v1176
        %1230 = vmatprep.subr.mxu0 %v1181
        %1231 = vmatpush1.msra.mxu0 %v1180
        %1232 = vmatprep.subr.mxu0 %v1185
        %1233 = vmatpush1.msra.mxu0 %v1184
        %1234 = vmatprep.subr.mxu0 %v1189
        %1235 = vmatpush1.msra.mxu0 %v1188
        %1236 = vmatprep.subr.mxu0 %v1193
        %1237 = vmatpush1.msra.mxu0 %v1192
        %1238 = vmatprep.subr.mxu0 %v1197
        %1239 = vmatpush1.msra.mxu0 %v1196
        %1240 = vmatprep.subr.mxu0 %v1201
        %1241 = vmatpush1.msra.mxu0 %v1200
        %1242 = vmatprep.subr.mxu0 0.0
        %1243 = vmatpush1.msra.mxu0 0.0
        %1244 = vmatprep.subr.mxu0 0.0
        %1245 = vmatpush1.msra.mxu0 0.0
        %1246 = vmatprep.subr.mxu0 0.0
        %1247 = vmatpush1.msra.mxu0 0.0
        %1248 = vmatprep.subr.mxu0 0.0
        %1249 = vmatpush1.msra.mxu0 0.0
        %1250 = vmatprep.subr.mxu0 0.0
        %1251 = vmatpush1.msra.mxu0 0.0
        %1252 = vmatprep.subr.mxu0 0.0
        %1253 = vmatpush1.msra.mxu0 0.0
        %1254 = vmatprep.subr.mxu0 0.0
        %1255 = vmatpush1.msra.mxu0 0.0
        %1256 = vmatprep.subr.mxu0 0.0
        %1257 = vmatpush1.msra.mxu0 0.0
        %1258 = vmatprep.subr.mxu0 0.0
        %1259 = vmatpush1.msra.mxu0 0.0
        %1260 = vmatprep.subr.mxu0 0.0
        %1261 = vmatpush1.msra.mxu0 0.0
        %1262 = vmatprep.subr.mxu0 0.0
        %1263 = vmatpush1.msra.mxu0 0.0
        %1264 = vmatprep.subr.mxu0 0.0
        %1265 = vmatpush1.msra.mxu0 0.0
        %1266 = vmatprep.subr.mxu0 0.0
        %1267 = vmatpush1.msra.mxu0 0.0
        %1268 = vmatprep.subr.mxu0 0.0
        %1269 = vmatpush1.msra.mxu0 0.0
        %1270 = vmatprep.subr.mxu0 0.0
        %1271 = vmatpush1.msra.mxu0 0.0
        %1272 = vmatprep.subr.mxu0 0.0
        %1273 = vmatpush1.msra.mxu0 0.0
        %1274 = vmatprep.mubr.f32.mxu0 0.0
        %1275 = vmatmul.mubr.f32.gmra.mrb[0].mxu0 %v1139
        %v1276 = vpop.f32.mrb[0].mxu0
        %v1277 = vadd.f32 %v1208, %v1276
        %v1278 = vpop.f32.mrb[0].mxu0
        %v1279 = vadd.f32 %v1208, %v1278
        %1280 = vdwg.mxu0
        %1281 = vmatprep.subr.mxu0 %v1143
        %1282 = vmatpush1.msra.mxu0 %v1142
        %1283 = vmatprep.subr.mxu0 %v1147
        %1284 = vmatpush1.msra.mxu0 %v1146
        %1285 = vmatprep.subr.mxu0 %v1151
        %1286 = vmatpush1.msra.mxu0 %v1150
        %1287 = vmatprep.subr.mxu0 %v1155
        %1288 = vmatpush1.msra.mxu0 %v1154
        %1289 = vmatprep.subr.mxu0 %v1159
        %1290 = vmatpush1.msra.mxu0 %v1158
        %1291 = vmatprep.subr.mxu0 %v1163
        %1292 = vmatpush1.msra.mxu0 %v1162
        %1293 = vmatprep.subr.mxu0 %v1167
        %1294 = vmatpush1.msra.mxu0 %v1166
        %1295 = vmatprep.subr.mxu0 %v1171
        %1296 = vmatpush1.msra.mxu0 %v1170
        %1297 = vmatprep.subr.mxu0 %v1175
        %1298 = vmatpush1.msra.mxu0 %v1174
        %1299 = vmatprep.subr.mxu0 %v1179
        %1300 = vmatpush1.msra.mxu0 %v1178
        %1301 = vmatprep.subr.mxu0 %v1183
        %1302 = vmatpush1.msra.mxu0 %v1182
        %1303 = vmatprep.subr.mxu0 %v1187
        %1304 = vmatpush1.msra.mxu0 %v1186
        %1305 = vmatprep.subr.mxu0 %v1191
        %1306 = vmatpush1.msra.mxu0 %v1190
        %1307 = vmatprep.subr.mxu0 %v1195
        %1308 = vmatpush1.msra.mxu0 %v1194
        %1309 = vmatprep.subr.mxu0 %v1199
        %1310 = vmatpush1.msra.mxu0 %v1198
        %1311 = vmatprep.subr.mxu0 %v1203
        %1312 = vmatpush1.msra.mxu0 %v1202
        %1313 = vmatprep.subr.mxu0 0.0
        %1314 = vmatpush1.msra.mxu0 0.0
        %1315 = vmatprep.subr.mxu0 0.0
        %1316 = vmatpush1.msra.mxu0 0.0
        %1317 = vmatprep.subr.mxu0 0.0
        %1318 = vmatpush1.msra.mxu0 0.0
        %1319 = vmatprep.subr.mxu0 0.0
        %1320 = vmatpush1.msra.mxu0 0.0
        %1321 = vmatprep.subr.mxu0 0.0
        %1322 = vmatpush1.msra.mxu0 0.0
        %1323 = vmatprep.subr.mxu0 0.0
        %1324 = vmatpush1.msra.mxu0 0.0
        %1325 = vmatprep.subr.mxu0 0.0
        %1326 = vmatpush1.msra.mxu0 0.0
        %1327 = vmatprep.subr.mxu0 0.0
        %1328 = vmatpush1.msra.mxu0 0.0
        %1329 = vmatprep.subr.mxu0 0.0
        %1330 = vmatpush1.msra.mxu0 0.0
        %1331 = vmatprep.subr.mxu0 0.0
        %1332 = vmatpush1.msra.mxu0 0.0
        %1333 = vmatprep.subr.mxu0 0.0
        %1334 = vmatpush1.msra.mxu0 0.0
        %1335 = vmatprep.subr.mxu0 0.0
        %1336 = vmatpush1.msra.mxu0 0.0
        %1337 = vmatprep.subr.mxu0 0.0
        %1338 = vmatpush1.msra.mxu0 0.0
        %1339 = vmatprep.subr.mxu0 0.0
        %1340 = vmatpush1.msra.mxu0 0.0
        %1341 = vmatprep.subr.mxu0 0.0
        %1342 = vmatpush1.msra.mxu0 0.0
        %1343 = vmatprep.subr.mxu0 0.0
        %1344 = vmatpush1.msra.mxu0 0.0
        %1345 = vmatprep.mubr.f32.mxu0 0.0
        %1346 = vmatmul.mubr.f32.gmra.mrb[0].mxu0 %v1139
        %v1347 = vpop.f32.mrb[0].mxu0
        %v1348 = vadd.f32 %v1208, %v1347
        %v1349 = vpop.f32.mrb[0].mxu0
        %v1350 = vadd.f32 %v1208, %v1349
        %1351 = vdwg.mxu0
        %v1352 = vmax.f32 %v1277, 0.0
        %v1353 = vmax.f32 %v1279, 0.0
        %v1354 = vmax.f32 %v1348, 0.0
        %v1355 = vmax.f32 %v1350, 0.0
        %1356 = vst [vmem:[%s272] sm:$0xff] %v1352
        %1357 = vst [vmem:[%s272 + $0x8] sm:$0xff] %v1353
        %1358 = vst [vmem:[%s272 + $0x10] sm:$0xff] %v1354
        %1359 = vst [vmem:[%s272 + $0x18] sm:$0xff] %v1355
        %s1360 = sand.u32 %s144, 1
        %s1361 = scalar_lea.sflag [#allocation6], %s1360
        %s1362 = sand.u32 %s144, 1
        %s1363 = smul.addr %s1362, 32
        %s1364 = scalar_lea.vmem [#allocation9], %s1363
        // Predicated region
        $region53: #{tpu_custom_call.1} parent=35 // pred_check
          %p1365 = pneg %p154
        $region54: #{tpu_custom_call.1} parent=35 // pred_check_branch
          %1367 = sbr.rel (%p1365) target = $region56
        $region55: #{tpu_custom_call.1} parent=35 // pred_region
          %s1368 = smul.u32 4, %s29
          %s1370 = ssub.s32 512, 512
          %1371 = vsyncadd %s1361, %s1370
          %s1372 = smul.addr %s28, 8
          %s1373 = sadd.s32 %s1368, %s1372
          %s1374 = smul.addr %s1373, 128
          %s1375 = scalar_lea.hbm %s4, %s1374
          %s1377 = sshll.u32 %s1364, 4
          %s1378 = int_to_ptr.vmem [resolvable:$true] %s1377
          %1380 = dma.vmem_to_hbm [thread:$0]  %s1378, 512, %s1375, %s1361
        $region56: #{tpu_custom_call.1} parent=35 // pred_fallthru
          _
      $region36: #{tpu_custom_call.1} parent=5 // pred_fallthru
        _
      %p1381 = scmp.le.s32.totalorder 2, %s19
      // Predicated region
      $region57: #{tpu_custom_call.1} parent=5 // pred_check
        %p1382 = pneg %p1381
      $region58: #{tpu_custom_call.1} parent=5 // pred_check_branch
        %1384 = sbr.rel (%p1382) target = $region60
      $region59: #{tpu_custom_call.1} parent=5 // pred_region
        %s1385 = ssub.s32 %s19, 2
        // Predicated region
        $region61: #{tpu_custom_call.1} parent=59 // pred_check
          %p1386 = pneg %p160
        $region62: #{tpu_custom_call.1} parent=59 // pred_check_branch
          %1388 = sbr.rel (%p1386) target = $region64
        $region63: #{tpu_custom_call.1} parent=59 // pred_region
          %s1389 = sand.u32 %s145, 1
          %s1390 = scalar_lea.sflag [#allocation6], %s1389
          %s1391 = sand.u32 %s145, 1
          %s1392 = smul.addr %s1391, 32
          %s1393 = scalar_lea.vmem [#allocation9], %s1392
          %1394 = dma.done %s1390, 512
        $region64: #{tpu_custom_call.1} parent=59 // pred_fallthru
          _
      $region60: #{tpu_custom_call.1} parent=5 // pred_fallthru
        _
    $region6: #{tpu_custom_call.1} parent=1 // loop_footer
      %s23 = sadd.s32 1, %s19
    $region7: #{tpu_custom_call.1} parent=1 // loop_footer_branch
      %18 = sbr.rel target = $region3
    $region8: #{tpu_custom_call.1} parent=1 // loop_exit
      _
    %1395 = vsyncpa [#allocation5], 1
    %s1396 = scalar_lea.sflag [#allocation5], 1
    %1397 = vsyncpa %s1396, 1
    %1398 = vsyncpa [#allocation8], 1
    %s1399 = scalar_lea.sflag [#allocation8], 1
    %1400 = vsyncpa %s1399, 1
    %1401 = vsyncpa [#allocation6], 1
    %s1402 = scalar_lea.sflag [#allocation6], 1
    %1403 = vsyncpa %s1402, 1

</llo_original>
